<compile_context>
chip_gen: v6e
topology: v6e:2x2x1
jax: 0.10.0
libtpu: 0.0.40
codegen_flags: <defaults>
</compile_context>

<pallas_src>
import math
from functools import partial

import jax
import jax.numpy as jnp
from jax import lax
from jax.experimental import pallas as pl
from jax.experimental.pallas import tpu as pltpu


def _attention_kernel(*refs, num_head, head_dim, gating):
    """One (batch, q-tile) per grid step; all heads handled inside.

    q_ref   : [1, Qt, Dk] bf16    m_ref : [1, K, Dv] bf16
    bias_ref: [1, Qt, K] f32      nb_ref: [H, Qt, K] f32
    wq_ref  : [Dk, H*d] bf16 (scale pre-folded)
    wk/wv   : [Dv, H*d] bf16      wg : [Dk, H*d] bf16   bg : [1, H*d] f32
    wo_ref  : [H*d, O]  bf16      bo : [1, O] f32
    out_ref : [1, Qt, O] f32
    k_scr/v_scr (scratch) : [K, H*d] bf16 (resident K/V projections per batch)
    """
    if gating:
        (q_ref, m_ref, bias_ref, nb_ref,
         wq_ref, wk_ref, wv_ref, wg_ref, bg_ref, wo_ref, bo_ref,
         out_ref, k_scr, v_scr) = refs
    else:
        (q_ref, m_ref, bias_ref, nb_ref,
         wq_ref, wk_ref, wv_ref, wo_ref, bo_ref,
         out_ref, k_scr, v_scr) = refs
        wg_ref = bg_ref = None

    H, d = num_head, head_dim
    qi = pl.program_id(1)

    # K/V projections depend only on the batch index: compute them once per
    # batch element (qi == 0 on the innermost "arbitrary" axis) into resident
    # bf16 scratch and reuse across all q-tiles.
    @pl.when(qi == 0)
    def _project_kv():
        md = m_ref[0]                                                    # [K, Dv] bf16
        k_scr[...] = jnp.dot(md, wk_ref[...],
                             preferred_element_type=jnp.float32).astype(jnp.bfloat16)
        v_scr[...] = jnp.dot(md, wv_ref[...],
                             preferred_element_type=jnp.float32).astype(jnp.bfloat16)

    qd = q_ref[0]                                                        # [Qt, Dk] bf16

    # Full-width (lane-dense) Q projection; 1/sqrt(d) already folded into Wq.
    qh_all = jnp.dot(qd, wq_ref[...],
                     preferred_element_type=jnp.float32).astype(jnp.bfloat16)  # [Qt, H*d]

    kh_all = k_scr[...]                                                  # [K, H*d] bf16
    vh_all = v_scr[...]                                                  # [K, H*d] bf16
    bias = bias_ref[0]                                                   # [Qt, K] f32

    ctx_parts = []
    for h in range(H):                       # static unrolled head loop
        lo, hi = h * d, (h + 1) * d
        qh = qh_all[:, lo:hi]                                            # [Qt, d]
        kh = kh_all[:, lo:hi]                                            # [K,  d]
        vh = vh_all[:, lo:hi]                                            # [K,  d]

        # logits = qh @ kh^T ("NT" matmul), f32 accumulation.
        logits = lax.dot_general(
            qh, kh, dimension_numbers=(((1,), (1,)), ((), ())),
            preferred_element_type=jnp.float32)                          # [Qt, K]
        logits = logits + bias + nb_ref[h]

        # Numerically stable f32 softmax over keys (EUP reciprocal).
        logits = logits - jnp.max(logits, axis=-1, keepdims=True)
        p = jnp.exp(logits)
        w = p * pl.reciprocal(jnp.sum(p, axis=-1, keepdims=True), approx=True)

        ctx_parts.append(jnp.dot(w.astype(jnp.bfloat16), vh,
                                 preferred_element_type=jnp.float32))    # [Qt, d]

    ctx = jnp.concatenate(ctx_parts, axis=-1)                            # [Qt, H*d] f32

    if gating:
        gate = jax.nn.sigmoid(
            jnp.dot(qd, wg_ref[...], preferred_element_type=jnp.float32)
            + bg_ref[...])                                               # [Qt, H*d] f32
        ctx = ctx * gate

    # Single full-contraction output projection (contraction H*d, output O).
    out = jnp.dot(ctx.astype(jnp.bfloat16), wo_ref[...],
                  preferred_element_type=jnp.float32) + bo_ref[...]
    out_ref[0] = out


def _pick_vmem_limit():
    try:
        cap = getattr(pltpu.get_tpu_info(), "vmem_capacity_bytes", 64 * 1024 * 1024)
    except Exception:
        cap = 64 * 1024 * 1024
    # Leave headroom below physical capacity; never below 32 MiB, never above 100 MiB.
    return int(min(max(cap - 16 * 1024 * 1024, 32 * 1024 * 1024), 100 * 1024 * 1024))


def attention_opt(q_data, m_data, bias, nonbatched_bias, params,
                  *, num_head, gating=True, q_tile=256):
    """Pallas wrapper reproducing AttentionOpt.forward (non-chunked path)."""
    B, Q, Dk = q_data.shape
    _, K, Dv = m_data.shape
    H = num_head
    assert Dk % H == 0 and Dv % H == 0
    d = Dk // H
    # The PyTorch logits matmul only type-checks when per-head key/value dims
    # match (always true for AlphaFold configs); mirror that requirement.
    assert Dv // H == d, "AttentionOpt forward requires key_dim == value_dim per head"
    Hd = H * d
    O = params["wo"].shape[-1]
    scale = 1.0 / math.sqrt(d)

    vmem_limit = _pick_vmem_limit()

    def vmem_estimate(qt):
        b = 0
        b += 2 * qt * Dk * 2 + 2 * K * Dv * 2             # q / m blocks (bf16, double-buffered)
        b += 2 * qt * K * 4 + 2 * H * qt * K * 4          # bias / nonbatched_bias blocks (f32)
        b += 2 * (Dk * Hd + 2 * Dv * Hd + Hd * O) * 2     # weights (bf16)
        b += (2 * (Dk * Hd * 2 + Hd * 4)) if gating else 0
        b += 2 * O * 4 + 2 * qt * O * 4                   # bo + output block
        b += 2 * K * Hd * 2                               # K/V scratch (bf16)
        b += 4 * qt * K * 4 + 4 * qt * Hd * 4             # in-kernel temporaries (rough)
        return b

    # Q-tile: large to amortize per-step overhead, clamped to the VMEM budget.
    Qt = min(Q, q_tile)
    while Qt > 128 and vmem_estimate(Qt) > 0.6 * vmem_limit:
        Qt //= 2

    # Pad Q up to a multiple of Qt (padded rows are sliced off at the end).
    Qp = ((Q + Qt - 1) // Qt) * Qt
    nQ = Qp // Qt

    # Pre-cast inputs once (halves DMA / VMEM for everything the kernel reads).
    q_bf = q_data.astype(jnp.bfloat16)
    m_bf = m_data.astype(jnp.bfloat16)
    bias_f = bias.astype(jnp.float32)
    nb_f = nonbatched_bias.astype(jnp.float32)
    if Qp != Q:
        pad = Qp - Q
        q_bf = jnp.pad(q_bf, ((0, 0), (0, pad), (0, 0)))
        bias_f = jnp.pad(bias_f, ((0, 0), (0, pad), (0, 0)))
        nb_f = jnp.pad(nb_f, ((0, 0), (0, pad), (0, 0)))

    # Pre-cast / pre-scale weights (scale folded into Wq).
    wq = (params["wq"] * scale).astype(jnp.bfloat16)      # [Dk, Hd]
    wk = params["wk"].astype(jnp.bfloat16)                # [Dv, Hd]
    wv = params["wv"].astype(jnp.bfloat16)                # [Dv, Hd]
    wo = params["wo"].astype(jnp.bfloat16)                # [Hd, O]
    bo = params["bo"].reshape(1, O).astype(jnp.float32)

    def weight_spec(shape):
        return pl.BlockSpec(shape, lambda b, qi: (0, 0))  # constant -> stays resident

    in_specs = [
        pl.BlockSpec((1, Qt, Dk), lambda b, qi: (b, qi, 0)),   # q_data
        pl.BlockSpec((1, K, Dv), lambda b, qi: (b, 0, 0)),     # m_data (resident over qi)
        pl.BlockSpec((1, Qt, K), lambda b, qi: (b, qi, 0)),    # bias
        pl.BlockSpec((H, Qt, K), lambda b, qi: (0, qi, 0)),    # nonbatched_bias (all heads)
        weight_spec((Dk, Hd)),                                 # Wq (scaled)
        weight_spec((Dv, Hd)),                                 # Wk
        weight_spec((Dv, Hd)),                                 # Wv
    ]
    args = [q_bf, m_bf, bias_f, nb_f, wq, wk, wv]
    if gating:
        wg = params["wg"].astype(jnp.bfloat16)                # [Dk, Hd]
        bg = params["bg"].reshape(1, Hd).astype(jnp.float32)
        in_specs += [weight_spec((Dk, Hd)), weight_spec((1, Hd))]
        args += [wg, bg]
    in_specs += [weight_spec((Hd, O)), weight_spec((1, O))]
    args += [wo, bo]

    kernel = partial(_attention_kernel, num_head=H, head_dim=d, gating=gating)

    out = pl.pallas_call(
        kernel,
        out_shape=jax.ShapeDtypeStruct((B, Qp, O), jnp.float32),
        grid=(B, nQ),
        in_specs=in_specs,
        out_specs=pl.BlockSpec((1, Qt, O), lambda b, qi: (b, qi, 0)),
        scratch_shapes=[pltpu.VMEM((K, Hd), jnp.bfloat16),     # K projection (per batch)
                        pltpu.VMEM((K, Hd), jnp.bfloat16)],    # V projection (per batch)
        compiler_params=pltpu.CompilerParams(
            dimension_semantics=("parallel", "arbitrary"),
            vmem_limit_bytes=vmem_limit),
    )(*args)

    return out[:, :Q, :] if Qp != Q else out


def attention_opt_reference(q_data, m_data, bias, nonbatched_bias, params,
                            *, num_head, gating=True):
    """Pure-JAX f32 reference mirroring the PyTorch forward."""
    B, Q, Dk = q_data.shape
    _, K, Dv = m_data.shape
    H = num_head
    kd, vd = Dk // H, Dv // H
    scale = 1.0 / math.sqrt(kd)

    q = (q_data @ params["wq"]) * scale
    k = m_data @ params["wk"]
    v = m_data @ params["wv"]
    q = q.reshape(B, Q, H, kd).transpose(0, 2, 1, 3)        # [B,H,Q,kd]
    k = k.reshape(B, K, H, vd).transpose(0, 2, 3, 1)        # [B,H,vd,K]
    v = v.reshape(B, K, H, vd).transpose(0, 2, 1, 3)        # [B,H,K,vd]
    logits = jnp.einsum("bhqd,bhdk->bhqk", q, k)
    logits = logits + bias[:, None, :, :] + nonbatched_bias[None]
    w = jax.nn.softmax(logits, axis=-1)
    ctx = jnp.einsum("bhqk,bhkd->bhqd", w, v).transpose(0, 2, 1, 3)  # [B,Q,H,vd]
    if gating:
        gate = jax.nn.sigmoid(q_data @ params["wg"] + params["bg"])
        ctx = ctx * gate.reshape(B, Q, H, vd)
    ctx = ctx.reshape(B, Q, H * vd)
    return ctx @ params["wo"] + params["bo"]


if __name__ == "__main__":
    # Small shapes consistent with the module.
    B, Q, K = 2, 8, 8
    num_head = 4
    all_key_dim = 32     # key_dim per head = 8
    all_value_dim = 32   # value_dim per head = 8
    output_dim = 32

    key = jax.random.PRNGKey(0)
    ks = jax.random.split(key, 12)

    q_data = jax.random.normal(ks[0], (B, Q, all_key_dim), jnp.float32)
    m_data = jax.random.normal(ks[1], (B, K, all_value_dim), jnp.float32)
    bias = jax.random.normal(ks[2], (B, Q, K), jnp.float32) * 0.5
    nonbatched_bias = jax.random.normal(ks[3], (num_head, Q, K), jnp.float32) * 0.5

    # Deterministic synthetic parameters ([in, out] layout, y = x @ W + b).
    glorot = lambda k, i, o: jax.random.normal(k, (i, o), jnp.float32) / math.sqrt(i)
    params = {
        "wq": glorot(ks[4], all_key_dim, all_key_dim),
        "wk": glorot(ks[5], all_value_dim, all_value_dim),
        "wv": glorot(ks[6], all_value_dim, all_value_dim),
        "wg": glorot(ks[7], all_key_dim, all_value_dim) * 0.1,
        "bg": jnp.ones((all_value_dim,), jnp.float32),          # 'gating' init bias=1
        "wo": glorot(ks[8], all_value_dim, output_dim),
        "bo": jnp.zeros((output_dim,), jnp.float32),
    }

    out = attention_opt(q_data, m_data, bias, nonbatched_bias, params,
                        num_head=num_head, gating=True)
    out = jax.block_until_ready(out)

    ref = attention_opt_reference(q_data, m_data, bias, nonbatched_bias, params,
                                  num_head=num_head, gating=True)
    assert out.shape == (B, Q, output_dim)
    # MXU operands are bf16 (f32 accumulation) -> ~1e-2 relative error vs f32 reference.
    assert jnp.allclose(out, ref, atol=5e-2, rtol=5e-2), "mismatch vs JAX reference"

    # TODO(synk): the optional chunked `iterative_qkv` path (q_chunk_size set) and a
    # flash-style K-tiled online softmax for very long key sequences are not implemented;
    # only the standard fused-softmax forward path is reproduced.
    print("KERNEL_OK")
</pallas_src>

<mosaic_0001>
module attributes {stable_mosaic.version = 11 : i64} {
  func.func @_attention_kernel(%arg0: i32, %arg1: i32, %arg2: memref<1x8x32xbf16, #tpu.memory_space<vmem>>, %arg3: memref<1x8x32xbf16, #tpu.memory_space<vmem>>, %arg4: memref<1x8x8xf32, #tpu.memory_space<vmem>>, %arg5: memref<4x8x8xf32, #tpu.memory_space<vmem>>, %arg6: memref<32x32xbf16, #tpu.memory_space<vmem>>, %arg7: memref<32x32xbf16, #tpu.memory_space<vmem>>, %arg8: memref<32x32xbf16, #tpu.memory_space<vmem>>, %arg9: memref<32x32xbf16, #tpu.memory_space<vmem>>, %arg10: memref<1x32xf32, #tpu.memory_space<vmem>>, %arg11: memref<32x32xbf16, #tpu.memory_space<vmem>>, %arg12: memref<1x32xf32, #tpu.memory_space<vmem>>, %arg13: memref<1x8x32xf32, #tpu.memory_space<vmem>>, %arg14: memref<8x32xbf16, #tpu.memory_space<vmem>>, %arg15: memref<8x32xbf16, #tpu.memory_space<vmem>>) attributes {dimension_semantics = [#tpu.dimension_semantics<parallel>, #tpu.dimension_semantics<arbitrary>], iteration_bounds = array<i64: 2, 1>, scalar_prefetch = 0 : i64, scratch_operands = 2 : i64, tpu.core_type = #tpu.core_type<tc>, window_params = [{transform_indices = @transform_0, window_bounds = array<i64: 1, 8, 32>}, {transform_indices = @transform_1, window_bounds = array<i64: 1, 8, 32>}, {transform_indices = @transform_2, window_bounds = array<i64: 1, 8, 8>}, {transform_indices = @transform_3, window_bounds = array<i64: 4, 8, 8>}, {pipeline_mode = #tpu.pipeline_mode<synchronous>, transform_indices = @transform_4, window_bounds = array<i64: 32, 32>}, {pipeline_mode = #tpu.pipeline_mode<synchronous>, transform_indices = @transform_5, window_bounds = array<i64: 32, 32>}, {pipeline_mode = #tpu.pipeline_mode<synchronous>, transform_indices = @transform_6, window_bounds = array<i64: 32, 32>}, {pipeline_mode = #tpu.pipeline_mode<synchronous>, transform_indices = @transform_7, window_bounds = array<i64: 32, 32>}, {pipeline_mode = #tpu.pipeline_mode<synchronous>, transform_indices = @transform_8, window_bounds = array<i64: 1, 32>}, {pipeline_mode = #tpu.pipeline_mode<synchronous>, transform_indices = @transform_9, window_bounds = array<i64: 32, 32>}, {pipeline_mode = #tpu.pipeline_mode<synchronous>, transform_indices = @transform_10, window_bounds = array<i64: 1, 32>}, {transform_indices = @transform_11, window_bounds = array<i64: 1, 8, 32>}]} {
    %c0_i32 = arith.constant 0 : i32
    %0 = arith.cmpi eq, %arg1, %c0_i32 : i32
    %1 = arith.extui %0 : i1 to i32
    %c0_i32_0 = arith.constant 0 : i32
    %2 = arith.cmpi ne, %1, %c0_i32_0 : i32
    scf.if %2 {
      %c0_51 = arith.constant 0 : index
      %c0_52 = arith.constant 0 : index
      %c0_53 = arith.constant 0 : index
      %113 = vector.load %arg3[%c0_51, %c0_52, %c0_53] : memref<1x8x32xbf16, #tpu.memory_space<vmem>>, vector<1x8x32xbf16>
      %114 = vector.shape_cast %113 : vector<1x8x32xbf16> to vector<8x32xbf16>
      %c0_54 = arith.constant 0 : index
      %c0_55 = arith.constant 0 : index
      %115 = vector.load %arg7[%c0_54, %c0_55] : memref<32x32xbf16, #tpu.memory_space<vmem>>, vector<32x32xbf16>
      %cst_56 = arith.constant dense<0.000000e+00> : vector<8x32xf32>
      %116 = tpu.matmul %114, %115, %cst_56 {dimension_numbers = #tpu.dot_dimension_numbers<[1], [0], [0], [1], [0, 0, 1, 1], [], []>} : vector<8x32xbf16>, vector<32x32xbf16>, vector<8x32xf32> -> vector<8x32xf32>
      %117 = arith.truncf %116 : vector<8x32xf32> to vector<8x32xbf16>
      %c0_57 = arith.constant 0 : index
      %c0_58 = arith.constant 0 : index
      %118 = vector.load %arg14[%c0_57, %c0_58] : memref<8x32xbf16, #tpu.memory_space<vmem>>, vector<8x32xbf16>
      tpu.vector_store %arg14[%c0_57, %c0_58], %117 {strides = array<i32>} : memref<8x32xbf16, #tpu.memory_space<vmem>>, vector<8x32xbf16>,
      %c0_59 = arith.constant 0 : index
      %c0_60 = arith.constant 0 : index
      %119 = vector.load %arg8[%c0_59, %c0_60] : memref<32x32xbf16, #tpu.memory_space<vmem>>, vector<32x32xbf16>
      %cst_61 = arith.constant dense<0.000000e+00> : vector<8x32xf32>
      %120 = tpu.matmul %114, %119, %cst_61 {dimension_numbers = #tpu.dot_dimension_numbers<[1], [0], [0], [1], [0, 0, 1, 1], [], []>} : vector<8x32xbf16>, vector<32x32xbf16>, vector<8x32xf32> -> vector<8x32xf32>
      %121 = arith.truncf %120 : vector<8x32xf32> to vector<8x32xbf16>
      %c0_62 = arith.constant 0 : index
      %c0_63 = arith.constant 0 : index
      %122 = vector.load %arg15[%c0_62, %c0_63] : memref<8x32xbf16, #tpu.memory_space<vmem>>, vector<8x32xbf16>
      tpu.vector_store %arg15[%c0_62, %c0_63], %121 {strides = array<i32>} : memref<8x32xbf16, #tpu.memory_space<vmem>>, vector<8x32xbf16>,
    } else {
    }
    %c0 = arith.constant 0 : index
    %c0_1 = arith.constant 0 : index
    %c0_2 = arith.constant 0 : index
    %3 = vector.load %arg2[%c0, %c0_1, %c0_2] : memref<1x8x32xbf16, #tpu.memory_space<vmem>>, vector<1x8x32xbf16>
    %4 = vector.shape_cast %3 : vector<1x8x32xbf16> to vector<8x32xbf16>
    %c0_3 = arith.constant 0 : index
    %c0_4 = arith.constant 0 : index
    %5 = vector.load %arg6[%c0_3, %c0_4] : memref<32x32xbf16, #tpu.memory_space<vmem>>, vector<32x32xbf16>
    %cst = arith.constant dense<0.000000e+00> : vector<8x32xf32>
    %6 = tpu.matmul %4, %5, %cst {dimension_numbers = #tpu.dot_dimension_numbers<[1], [0], [0], [1], [0, 0, 1, 1], [], []>} : vector<8x32xbf16>, vector<32x32xbf16>, vector<8x32xf32> -> vector<8x32xf32>
    %7 = arith.truncf %6 : vector<8x32xf32> to vector<8x32xbf16>
    %c0_5 = arith.constant 0 : index
    %c0_6 = arith.constant 0 : index
    %8 = vector.load %arg14[%c0_5, %c0_6] : memref<8x32xbf16, #tpu.memory_space<vmem>>, vector<8x32xbf16>
    %c0_7 = arith.constant 0 : index
    %c0_8 = arith.constant 0 : index
    %9 = vector.load %arg15[%c0_7, %c0_8] : memref<8x32xbf16, #tpu.memory_space<vmem>>, vector<8x32xbf16>
    %c0_9 = arith.constant 0 : index
    %c0_10 = arith.constant 0 : index
    %c0_11 = arith.constant 0 : index
    %10 = vector.load %arg4[%c0_9, %c0_10, %c0_11] : memref<1x8x8xf32, #tpu.memory_space<vmem>>, vector<1x8x8xf32>
    %11 = vector.shape_cast %10 : vector<1x8x8xf32> to vector<8x8xf32>
    %12 = vector.extract_strided_slice %7 {offsets = [0, 0], sizes = [8, 8], strides = [1, 1]} : vector<8x32xbf16> to vector<8x8xbf16>
    %13 = vector.extract_strided_slice %8 {offsets = [0, 0], sizes = [8, 8], strides = [1, 1]} : vector<8x32xbf16> to vector<8x8xbf16>
    %14 = vector.extract_strided_slice %9 {offsets = [0, 0], sizes = [8, 8], strides = [1, 1]} : vector<8x32xbf16> to vector<8x8xbf16>
    %cst_12 = arith.constant dense<0.000000e+00> : vector<8x8xf32>
    %15 = tpu.matmul %12, %13, %cst_12 {dimension_numbers = #tpu.dot_dimension_numbers<[1], [1], [0], [0], [0, 0, 1, 0], [], []>} : vector<8x8xbf16>, vector<8x8xbf16>, vector<8x8xf32> -> vector<8x8xf32>
    %16 = arith.addf %15, %11 : vector<8x8xf32>
    %c0_13 = arith.constant 0 : index
    %c0_14 = arith.constant 0 : index
    %c0_15 = arith.constant 0 : index
    %17 = vector.load %arg5[%c0_13, %c0_14, %c0_15] : memref<4x8x8xf32, #tpu.memory_space<vmem>>, vector<1x8x8xf32>
    %18 = vector.shape_cast %17 : vector<1x8x8xf32> to vector<8x8xf32>
    %19 = arith.addf %16, %18 : vector<8x8xf32>
    %cst_16 = arith.constant dense<0xFF800000> : vector<8xf32>
    %20 = vector.multi_reduction <maximumf>, %19, %cst_16 [1] : vector<8x8xf32> to vector<8xf32>
    %21 = vector.shape_cast %20 : vector<8xf32> to vector<8x1xf32>
    %22 = vector.broadcast %21 : vector<8x1xf32> to vector<8x8xf32>
    %23 = arith.subf %19, %22 : vector<8x8xf32>
    %24 = math.exp %23 : vector<8x8xf32>
    %cst_17 = arith.constant dense<0.000000e+00> : vector<8xf32>
    %25 = vector.multi_reduction <add>, %24, %cst_17 [1] : vector<8x8xf32> to vector<8xf32>
    %26 = vector.shape_cast %25 : vector<8xf32> to vector<8x1xf32>
    %27 = tpu.reciprocal %26 {approx = true} : vector<8x1xf32> -> vector<8x1xf32>
    %28 = vector.broadcast %27 : vector<8x1xf32> to vector<8x8xf32>
    %29 = arith.mulf %24, %28 : vector<8x8xf32>
    %30 = arith.truncf %29 : vector<8x8xf32> to vector<8x8xbf16>
    %cst_18 = arith.constant dense<0.000000e+00> : vector<8x8xf32>
    %31 = tpu.matmul %30, %14, %cst_18 {dimension_numbers = #tpu.dot_dimension_numbers<[1], [0], [0], [1], [0, 0, 1, 1], [], []>} : vector<8x8xbf16>, vector<8x8xbf16>, vector<8x8xf32> -> vector<8x8xf32>
    %32 = vector.extract_strided_slice %7 {offsets = [0, 8], sizes = [8, 8], strides = [1, 1]} : vector<8x32xbf16> to vector<8x8xbf16>
    %33 = vector.extract_strided_slice %8 {offsets = [0, 8], sizes = [8, 8], strides = [1, 1]} : vector<8x32xbf16> to vector<8x8xbf16>
    %34 = vector.extract_strided_slice %9 {offsets = [0, 8], sizes = [8, 8], strides = [1, 1]} : vector<8x32xbf16> to vector<8x8xbf16>
    %cst_19 = arith.constant dense<0.000000e+00> : vector<8x8xf32>
    %35 = tpu.matmul %32, %33, %cst_19 {dimension_numbers = #tpu.dot_dimension_numbers<[1], [1], [0], [0], [0, 0, 1, 0], [], []>} : vector<8x8xbf16>, vector<8x8xbf16>, vector<8x8xf32> -> vector<8x8xf32>
    %36 = arith.addf %35, %11 : vector<8x8xf32>
    %c1 = arith.constant 1 : index
    %c0_20 = arith.constant 0 : index
    %c0_21 = arith.constant 0 : index
    %37 = vector.load %arg5[%c1, %c0_20, %c0_21] : memref<4x8x8xf32, #tpu.memory_space<vmem>>, vector<1x8x8xf32>
    %38 = vector.shape_cast %37 : vector<1x8x8xf32> to vector<8x8xf32>
    %39 = arith.addf %36, %38 : vector<8x8xf32>
    %cst_22 = arith.constant dense<0xFF800000> : vector<8xf32>
    %40 = vector.multi_reduction <maximumf>, %39, %cst_22 [1] : vector<8x8xf32> to vector<8xf32>
    %41 = vector.shape_cast %40 : vector<8xf32> to vector<8x1xf32>
    %42 = vector.broadcast %41 : vector<8x1xf32> to vector<8x8xf32>
    %43 = arith.subf %39, %42 : vector<8x8xf32>
    %44 = math.exp %43 : vector<8x8xf32>
    %cst_23 = arith.constant dense<0.000000e+00> : vector<8xf32>
    %45 = vector.multi_reduction <add>, %44, %cst_23 [1] : vector<8x8xf32> to vector<8xf32>
    %46 = vector.shape_cast %45 : vector<8xf32> to vector<8x1xf32>
    %47 = tpu.reciprocal %46 {approx = true} : vector<8x1xf32> -> vector<8x1xf32>
    %48 = vector.broadcast %47 : vector<8x1xf32> to vector<8x8xf32>
    %49 = arith.mulf %44, %48 : vector<8x8xf32>
    %50 = arith.truncf %49 : vector<8x8xf32> to vector<8x8xbf16>
    %cst_24 = arith.constant dense<0.000000e+00> : vector<8x8xf32>
    %51 = tpu.matmul %50, %34, %cst_24 {dimension_numbers = #tpu.dot_dimension_numbers<[1], [0], [0], [1], [0, 0, 1, 1], [], []>} : vector<8x8xbf16>, vector<8x8xbf16>, vector<8x8xf32> -> vector<8x8xf32>
    %52 = vector.extract_strided_slice %7 {offsets = [0, 16], sizes = [8, 8], strides = [1, 1]} : vector<8x32xbf16> to vector<8x8xbf16>
    %53 = vector.extract_strided_slice %8 {offsets = [0, 16], sizes = [8, 8], strides = [1, 1]} : vector<8x32xbf16> to vector<8x8xbf16>
    %54 = vector.extract_strided_slice %9 {offsets = [0, 16], sizes = [8, 8], strides = [1, 1]} : vector<8x32xbf16> to vector<8x8xbf16>
    %cst_25 = arith.constant dense<0.000000e+00> : vector<8x8xf32>
    %55 = tpu.matmul %52, %53, %cst_25 {dimension_numbers = #tpu.dot_dimension_numbers<[1], [1], [0], [0], [0, 0, 1, 0], [], []>} : vector<8x8xbf16>, vector<8x8xbf16>, vector<8x8xf32> -> vector<8x8xf32>
    %56 = arith.addf %55, %11 : vector<8x8xf32>
    %c2 = arith.constant 2 : index
    %c0_26 = arith.constant 0 : index
    %c0_27 = arith.constant 0 : index
    %57 = vector.load %arg5[%c2, %c0_26, %c0_27] : memref<4x8x8xf32, #tpu.memory_space<vmem>>, vector<1x8x8xf32>
    %58 = vector.shape_cast %57 : vector<1x8x8xf32> to vector<8x8xf32>
    %59 = arith.addf %56, %58 : vector<8x8xf32>
    %cst_28 = arith.constant dense<0xFF800000> : vector<8xf32>
    %60 = vector.multi_reduction <maximumf>, %59, %cst_28 [1] : vector<8x8xf32> to vector<8xf32>
    %61 = vector.shape_cast %60 : vector<8xf32> to vector<8x1xf32>
    %62 = vector.broadcast %61 : vector<8x1xf32> to vector<8x8xf32>
    %63 = arith.subf %59, %62 : vector<8x8xf32>
    %64 = math.exp %63 : vector<8x8xf32>
    %cst_29 = arith.constant dense<0.000000e+00> : vector<8xf32>
    %65 = vector.multi_reduction <add>, %64, %cst_29 [1] : vector<8x8xf32> to vector<8xf32>
    %66 = vector.shape_cast %65 : vector<8xf32> to vector<8x1xf32>
    %67 = tpu.reciprocal %66 {approx = true} : vector<8x1xf32> -> vector<8x1xf32>
    %68 = vector.broadcast %67 : vector<8x1xf32> to vector<8x8xf32>
    %69 = arith.mulf %64, %68 : vector<8x8xf32>
    %70 = arith.truncf %69 : vector<8x8xf32> to vector<8x8xbf16>
    %cst_30 = arith.constant dense<0.000000e+00> : vector<8x8xf32>
    %71 = tpu.matmul %70, %54, %cst_30 {dimension_numbers = #tpu.dot_dimension_numbers<[1], [0], [0], [1], [0, 0, 1, 1], [], []>} : vector<8x8xbf16>, vector<8x8xbf16>, vector<8x8xf32> -> vector<8x8xf32>
    %72 = vector.extract_strided_slice %7 {offsets = [0, 24], sizes = [8, 8], strides = [1, 1]} : vector<8x32xbf16> to vector<8x8xbf16>
    %73 = vector.extract_strided_slice %8 {offsets = [0, 24], sizes = [8, 8], strides = [1, 1]} : vector<8x32xbf16> to vector<8x8xbf16>
    %74 = vector.extract_strided_slice %9 {offsets = [0, 24], sizes = [8, 8], strides = [1, 1]} : vector<8x32xbf16> to vector<8x8xbf16>
    %cst_31 = arith.constant dense<0.000000e+00> : vector<8x8xf32>
    %75 = tpu.matmul %72, %73, %cst_31 {dimension_numbers = #tpu.dot_dimension_numbers<[1], [1], [0], [0], [0, 0, 1, 0], [], []>} : vector<8x8xbf16>, vector<8x8xbf16>, vector<8x8xf32> -> vector<8x8xf32>
    %76 = arith.addf %75, %11 : vector<8x8xf32>
    %c3 = arith.constant 3 : index
    %c0_32 = arith.constant 0 : index
    %c0_33 = arith.constant 0 : index
    %77 = vector.load %arg5[%c3, %c0_32, %c0_33] : memref<4x8x8xf32, #tpu.memory_space<vmem>>, vector<1x8x8xf32>
    %78 = vector.shape_cast %77 : vector<1x8x8xf32> to vector<8x8xf32>
    %79 = arith.addf %76, %78 : vector<8x8xf32>
    %cst_34 = arith.constant dense<0xFF800000> : vector<8xf32>
    %80 = vector.multi_reduction <maximumf>, %79, %cst_34 [1] : vector<8x8xf32> to vector<8xf32>
    %81 = vector.shape_cast %80 : vector<8xf32> to vector<8x1xf32>
    %82 = vector.broadcast %81 : vector<8x1xf32> to vector<8x8xf32>
    %83 = arith.subf %79, %82 : vector<8x8xf32>
    %84 = math.exp %83 : vector<8x8xf32>
    %cst_35 = arith.constant dense<0.000000e+00> : vector<8xf32>
    %85 = vector.multi_reduction <add>, %84, %cst_35 [1] : vector<8x8xf32> to vector<8xf32>
    %86 = vector.shape_cast %85 : vector<8xf32> to vector<8x1xf32>
    %87 = tpu.reciprocal %86 {approx = true} : vector<8x1xf32> -> vector<8x1xf32>
    %88 = vector.broadcast %87 : vector<8x1xf32> to vector<8x8xf32>
    %89 = arith.mulf %84, %88 : vector<8x8xf32>
    %90 = arith.truncf %89 : vector<8x8xf32> to vector<8x8xbf16>
    %cst_36 = arith.constant dense<0.000000e+00> : vector<8x8xf32>
    %91 = tpu.matmul %90, %74, %cst_36 {dimension_numbers = #tpu.dot_dimension_numbers<[1], [0], [0], [1], [0, 0, 1, 1], [], []>} : vector<8x8xbf16>, vector<8x8xbf16>, vector<8x8xf32> -> vector<8x8xf32>
    %92 = tpu.concatenate %31, %51, %71, %91 in 1 : vector<8x8xf32>, vector<8x8xf32>, vector<8x8xf32>, vector<8x8xf32> -> vector<8x32xf32>
    %c0_37 = arith.constant 0 : index
    %c0_38 = arith.constant 0 : index
    %93 = vector.load %arg9[%c0_37, %c0_38] : memref<32x32xbf16, #tpu.memory_space<vmem>>, vector<32x32xbf16>
    %cst_39 = arith.constant dense<0.000000e+00> : vector<8x32xf32>
    %94 = tpu.matmul %4, %93, %cst_39 {dimension_numbers = #tpu.dot_dimension_numbers<[1], [0], [0], [1], [0, 0, 1, 1], [], []>} : vector<8x32xbf16>, vector<32x32xbf16>, vector<8x32xf32> -> vector<8x32xf32>
    %c0_40 = arith.constant 0 : index
    %c0_41 = arith.constant 0 : index
    %95 = vector.load %arg10[%c0_40, %c0_41] : memref<1x32xf32, #tpu.memory_space<vmem>>, vector<1x32xf32>
    %96 = vector.broadcast %95 : vector<1x32xf32> to vector<8x32xf32>
    %97 = arith.addf %94, %96 : vector<8x32xf32>
    %98 = arith.negf %97 : vector<8x32xf32>
    %99 = math.exp %98 : vector<8x32xf32>
    %cst_42 = arith.constant 1.000000e+00 : f32
    %100 = vector.broadcast %cst_42 : f32 to vector<8x32xf32>
    %101 = arith.addf %100, %99 : vector<8x32xf32>
    %102 = arith.divf %100, %101 : vector<8x32xf32>
    %103 = arith.mulf %92, %102 : vector<8x32xf32>
    %104 = arith.truncf %103 : vector<8x32xf32> to vector<8x32xbf16>
    %c0_43 = arith.constant 0 : index
    %c0_44 = arith.constant 0 : index
    %105 = vector.load %arg11[%c0_43, %c0_44] : memref<32x32xbf16, #tpu.memory_space<vmem>>, vector<32x32xbf16>
    %cst_45 = arith.constant dense<0.000000e+00> : vector<8x32xf32>
    %106 = tpu.matmul %104, %105, %cst_45 {dimension_numbers = #tpu.dot_dimension_numbers<[1], [0], [0], [1], [0, 0, 1, 1], [], []>} : vector<8x32xbf16>, vector<32x32xbf16>, vector<8x32xf32> -> vector<8x32xf32>
    %c0_46 = arith.constant 0 : index
    %c0_47 = arith.constant 0 : index
    %107 = vector.load %arg12[%c0_46, %c0_47] : memref<1x32xf32, #tpu.memory_space<vmem>>, vector<1x32xf32>
    %108 = vector.broadcast %107 : vector<1x32xf32> to vector<8x32xf32>
    %109 = arith.addf %106, %108 : vector<8x32xf32>
    %c0_48 = arith.constant 0 : index
    %c0_49 = arith.constant 0 : index
    %c0_50 = arith.constant 0 : index
    %110 = vector.load %arg13[%c0_48, %c0_49, %c0_50] : memref<1x8x32xf32, #tpu.memory_space<vmem>>, vector<1x8x32xf32>
    %111 = vector.shape_cast %110 : vector<1x8x32xf32> to vector<8x32xf32>
    %112 = vector.shape_cast %109 : vector<8x32xf32> to vector<1x8x32xf32>
    tpu.vector_store %arg13[%c0_48, %c0_49, %c0_50], %112 {strides = array<i32>} : memref<1x8x32xf32, #tpu.memory_space<vmem>>, vector<1x8x32xf32>,
    return
  }
  func.func @transform_0(%arg0: i32, %arg1: i32) -> (i32, i32, i32) {
    %c0_i32 = arith.constant 0 : i32
    %c0_i32_0 = arith.constant 0 : i32
    return %arg0, %arg1, %c0_i32 : i32, i32, i32
  }
  func.func @transform_1(%arg0: i32, %arg1: i32) -> (i32, i32, i32) {
    %c0_i32 = arith.constant 0 : i32
    %c0_i32_0 = arith.constant 0 : i32
    %c0_i32_1 = arith.constant 0 : i32
    return %arg0, %c0_i32, %c0_i32_0 : i32, i32, i32
  }
  func.func @transform_2(%arg0: i32, %arg1: i32) -> (i32, i32, i32) {
    %c0_i32 = arith.constant 0 : i32
    %c0_i32_0 = arith.constant 0 : i32
    return %arg0, %arg1, %c0_i32 : i32, i32, i32
  }
  func.func @transform_3(%arg0: i32, %arg1: i32) -> (i32, i32, i32) {
    %c0_i32 = arith.constant 0 : i32
    %c0_i32_0 = arith.constant 0 : i32
    %c0_i32_1 = arith.constant 0 : i32
    return %c0_i32, %arg1, %c0_i32_0 : i32, i32, i32
  }
  func.func @transform_4(%arg0: i32, %arg1: i32) -> (i32, i32) {
    %c0_i32 = arith.constant 0 : i32
    %c0_i32_0 = arith.constant 0 : i32
    %c0_i32_1 = arith.constant 0 : i32
    return %c0_i32, %c0_i32_0 : i32, i32
  }
  func.func @transform_5(%arg0: i32, %arg1: i32) -> (i32, i32) {
    %c0_i32 = arith.constant 0 : i32
    %c0_i32_0 = arith.constant 0 : i32
    %c0_i32_1 = arith.constant 0 : i32
    return %c0_i32, %c0_i32_0 : i32, i32
  }
  func.func @transform_6(%arg0: i32, %arg1: i32) -> (i32, i32) {
    %c0_i32 = arith.constant 0 : i32
    %c0_i32_0 = arith.constant 0 : i32
    %c0_i32_1 = arith.constant 0 : i32
    return %c0_i32, %c0_i32_0 : i32, i32
  }
  func.func @transform_7(%arg0: i32, %arg1: i32) -> (i32, i32) {
    %c0_i32 = arith.constant 0 : i32
    %c0_i32_0 = arith.constant 0 : i32
    %c0_i32_1 = arith.constant 0 : i32
    return %c0_i32, %c0_i32_0 : i32, i32
  }
  func.func @transform_8(%arg0: i32, %arg1: i32) -> (i32, i32) {
    %c0_i32 = arith.constant 0 : i32
    %c0_i32_0 = arith.constant 0 : i32
    %c0_i32_1 = arith.constant 0 : i32
    return %c0_i32, %c0_i32_0 : i32, i32
  }
  func.func @transform_9(%arg0: i32, %arg1: i32) -> (i32, i32) {
    %c0_i32 = arith.constant 0 : i32
    %c0_i32_0 = arith.constant 0 : i32
    %c0_i32_1 = arith.constant 0 : i32
    return %c0_i32, %c0_i32_0 : i32, i32
  }
  func.func @transform_10(%arg0: i32, %arg1: i32) -> (i32, i32) {
    %c0_i32 = arith.constant 0 : i32
    %c0_i32_0 = arith.constant 0 : i32
    %c0_i32_1 = arith.constant 0 : i32
    return %c0_i32, %c0_i32_0 : i32, i32
  }
  func.func @transform_11(%arg0: i32, %arg1: i32) -> (i32, i32, i32) {
    %c0_i32 = arith.constant 0 : i32
    %c0_i32_0 = arith.constant 0 : i32
    return %arg0, %arg1, %c0_i32 : i32, i32, i32
  }
}

</mosaic_0001>

<llo_original>
// kernel: tpu_custom_call.1
$region0: #{tpu_custom_call.1}
  #allocation0 [shape = 'u32[]', space=smem, size = 0x4, offset = 0x4, fixed_abs, tag = 'smem constant byte address 0x4 - core index']
  #allocation1 [shape = 'u32[144,128]{1,0:T(1,128)}', space=vmem, size = 0x12000, scoped, tag = 'internal scratch']
  #allocation2 [shape = 'bf16[8,32]{1,0:T(8,128)(2,1)}', space=vmem, size = 0x800, scoped, tag = 'scratch operand']
  #allocation3 [shape = 'bf16[8,32]{1,0:T(8,128)(2,1)}', space=vmem, size = 0x800, scoped, tag = 'scratch operand']
  %s0 = inlined_call_operand.hbm [shape: bf16[2,8,32], index: 0, kind: input, shape index: {}]
  %s1 = inlined_call_operand.hbm [shape: bf16[2,8,32], index: 1, kind: input, shape index: {}]
  %s2 = inlined_call_operand.hbm [shape: f32[2,8,8], index: 2, kind: input, shape index: {}]
  %s3 = inlined_call_operand.hbm [shape: f32[4,8,8], index: 3, kind: input, shape index: {}]
  %s4 = inlined_call_operand.hbm [shape: bf16[32,32], index: 4, kind: input, shape index: {}]
  %s5 = inlined_call_operand.hbm [shape: bf16[32,32], index: 5, kind: input, shape index: {}]
  %s6 = inlined_call_operand.hbm [shape: bf16[32,32], index: 6, kind: input, shape index: {}]
  %s7 = inlined_call_operand.hbm [shape: bf16[32,32], index: 7, kind: input, shape index: {}]
  %s8 = inlined_call_operand.hbm [shape: f32[1,32], index: 8, kind: input, shape index: {}]
  %s9 = inlined_call_operand.vmem [shape: bf16[32,32], index: 9, kind: input, shape index: {}]
  %s10 = inlined_call_operand.vmem [shape: f32[1,32], index: 10, kind: input, shape index: {}]
  %s11 = inlined_call_operand.hbm [shape: f32[2,8,32], index: 11, kind: output, shape index: {}]
  %s12 = sld [smem:[#allocation0]]
  $region117: #{tpu_custom_call.1} parent=0
    _
  %s14 = ssub.s32 1, %s12
  %s15 = scalar_select 0, %s14, %s12
  $region1: #{tpu_custom_call.1} parent=0
    #allocation4 [shape = 'u8[4096]{0}', space=vmem, size = 0x1000, scoped, tag = 'input window, operand 0']
    #allocation5 [shape = 's32[2]{0}', space=sflag, size = 0x8, scoped, tag = 'scoped memory for tpu_custom_call.1']
    #allocation6 [shape = 's32[2]{0}', space=sflag, size = 0x8, scoped, tag = 'scoped memory for tpu_custom_call.1']
    #allocation7 [shape = 'u8[4096]{0}', space=vmem, size = 0x1000, scoped, tag = 'input window, operand 1']
    #allocation8 [shape = 's32[2]{0}', space=sflag, size = 0x8, scoped, tag = 'scoped memory for tpu_custom_call.1']
    #allocation9 [shape = 'u8[8192]{0}', space=vmem, size = 0x2000, scoped, tag = 'input window, operand 2']
    #allocation10 [shape = 'u8[16384]{0}', space=vmem, size = 0x4000, scoped, tag = 'input window, operand 3, single buffered']
    #allocation11 [shape = 's32[1]{0}', space=sflag, size = 0x4, scoped, tag = 'scoped memory for tpu_custom_call.1']
    #allocation12 [shape = 'u8[8192]{0}', space=vmem, size = 0x2000, scoped, tag = 'input window, operand 4, single buffered']
    #allocation13 [shape = 'u8[8192]{0}', space=vmem, size = 0x2000, scoped, tag = 'input window, operand 5, single buffered']
    #allocation14 [shape = 's32[1]{0}', space=sflag, size = 0x4, scoped, tag = 'scoped memory for tpu_custom_call.1']
    #allocation15 [shape = 'u8[8192]{0}', space=vmem, size = 0x2000, scoped, tag = 'input window, operand 6, single buffered']
    #allocation16 [shape = 'u8[8192]{0}', space=vmem, size = 0x2000, scoped, tag = 'input window, operand 7, single buffered']
    #allocation17 [shape = 's32[1]{0}', space=sflag, size = 0x4, scoped, tag = 'scoped memory for tpu_custom_call.1']
    #allocation18 [shape = 'u8[512]{0}', space=vmem, size = 0x400, scoped, tag = 'input window, operand 8, single buffered']
    #allocation19 [shape = 'u8[8192]{0}', space=vmem, size = 0x2000, scoped, tag = 'output window, operand 0']
    %16 = vsyncpa [#allocation5], 0
    %s17 = scalar_lea.sflag [#allocation5], 1
    %18 = vsyncpa %s17, 0
    %19 = vsyncpa [#allocation8], 0
    %s20 = scalar_lea.sflag [#allocation8], 1
    %21 = vsyncpa %s20, 0
    %22 = vsyncpa [#allocation11], 0
    %23 = vsyncpa [#allocation14], 0
    %24 = vsyncpa [#allocation17], 0
    %25 = vsyncpa [#allocation6], 0
    %s26 = scalar_lea.sflag [#allocation6], 1
    %27 = vsyncpa %s26, 0
    loop: start=0, step=1, limit=4
    $region2: #{tpu_custom_call.1} parent=1 // loop_pre_header
      _
    $region3: #{tpu_custom_call.1} parent=1 // loop_header
      %s29 = sphi 0, %s33
      %p30 = scmp.ge.s32.totalorder %s29, 4
      %s36 = sphi 0, %s48
      %s37 = sphi 0, %s44
      %s38 = sphi 0, %s36
      %s39 = sphi 0, %s37
      %s40 = sphi 0, %s38
      %s41 = sphi 0, %s39
      %s53 = sphi 0, %s55
      %s56 = sphi 0, %s53
      %s57 = sphi 0, %s56
      %s73 = sphi 0, %s57
      %s79 = sphi 0, %s81
      %s82 = sphi 0, %s79
      %s83 = sphi 0, %s82
      %s99 = sphi 0, %s83
      %s107 = sphi 0, %s109
      %s110 = sphi 0, %s107
      %s111 = sphi 0, %s110
      %s127 = sphi 0, %s111
      %s133 = sphi 0, %s135
      %s136 = sphi 0, %s133
      %s137 = sphi 0, %s136
      %s153 = sphi 0, %s137
      %s157 = sphi 0, %s157
      %s159 = sphi 0, %s157
      %s160 = sphi 0, %s159
      %s174 = sphi 0, %s160
      %s178 = sphi 0, %s178
      %s180 = sphi 0, %s178
      %s181 = sphi 0, %s180
      %s195 = sphi 0, %s181
      %s199 = sphi 0, %s199
      %s201 = sphi 0, %s199
      %s202 = sphi 0, %s201
      %s216 = sphi 0, %s202
      %s220 = sphi 0, %s220
      %s222 = sphi 0, %s220
      %s223 = sphi 0, %s222
      %s237 = sphi 0, %s223
      %s241 = sphi 0, %s241
      %s243 = sphi 0, %s241
      %s244 = sphi 0, %s243
      %s258 = sphi 0, %s244
      %s262 = sphi 0, %s262
      %s264 = sphi 0, %s262
      %s265 = sphi 0, %s264
      %s279 = sphi 0, %s265
      %s283 = sphi 0, %s283
      %s285 = sphi 0, %s283
      %s286 = sphi 0, %s285
      %s300 = sphi 0, %s286
      %s308 = sphi 0, %s310
      %s311 = sphi 0, %s308
      %s312 = sphi 0, %s311
      %s328 = sphi 0, %s312
    $region4: #{tpu_custom_call.1} parent=1 // loop_header_branch
      %32 = sbr.rel (%p30) target = $region8
    $region5: #{tpu_custom_call.1} parent=1 // loop_body
      %s34 = ssub.s32 %s29, 1
      %s35 = ssub.s32 %s29, 2
      %s42 = sadd.s32 1, %s37
      %p43 = scmp.ge.s32.totalorder %s42, 1
      %s44 = scalar_select %p43, 0, %s42
      %s45 = sadd.s32 1, %s36
      %s46 = scalar_select %p43, %s45, %s36
      %p47 = scmp.ge.s32.totalorder %s46, 2
      %s48 = scalar_select %p47, 0, %s46
      %s49 = ssub.s32 %s36, %s48
      %s50 = ssub.s32 %s37, %s44
      %s51 = sor.u32 %s49, %s50
      %p52 = scmp.eq.s32.totalorder %s51, 0
      %s54 = sadd.s32 %s53, 1
      %s55 = scalar_select %p52, %s53, %s54
      %p58 = pneg %p52
      %p59 = scmp.eq.s32.totalorder %s29, 1
      %p60 = por %p58, %p59
      %p61 = scmp.ne.s32.totalorder %s53, %s56
      %p62 = scmp.eq.s32.totalorder %s29, 0
      %p63 = por %p61, %p62
      %p64 = scmp.ne.s32.totalorder %s53, %s56
      %p65 = scmp.eq.s32.totalorder %s34, 1
      %p66 = por %p64, %p65
      %p67 = scmp.ne.s32.totalorder %s56, %s57
      %p68 = scmp.eq.s32.totalorder %s34, 0
      %p69 = por %p67, %p68
      %p70 = scmp.ne.s32.totalorder %s56, %s57
      %p71 = scmp.eq.s32.totalorder %s35, 1
      %p72 = por %p70, %p71
      %p74 = scmp.ne.s32.totalorder %s57, %s73
      %p75 = scmp.eq.s32.totalorder %s35, 0
      %p76 = por %p74, %p75
      %s77 = ssub.s32 %s36, %s48
      %p78 = scmp.eq.s32.totalorder %s77, 0
      %s80 = sadd.s32 %s79, 1
      %s81 = scalar_select %p78, %s79, %s80
      %p84 = pneg %p78
      %p85 = scmp.eq.s32.totalorder %s29, 1
      %p86 = por %p84, %p85
      %p87 = scmp.ne.s32.totalorder %s79, %s82
      %p88 = scmp.eq.s32.totalorder %s29, 0
      %p89 = por %p87, %p88
      %p90 = scmp.ne.s32.totalorder %s79, %s82
      %p91 = scmp.eq.s32.totalorder %s34, 1
      %p92 = por %p90, %p91
      %p93 = scmp.ne.s32.totalorder %s82, %s83
      %p94 = scmp.eq.s32.totalorder %s34, 0
      %p95 = por %p93, %p94
      %p96 = scmp.ne.s32.totalorder %s82, %s83
      %p97 = scmp.eq.s32.totalorder %s35, 1
      %p98 = por %p96, %p97
      %p100 = scmp.ne.s32.totalorder %s83, %s99
      %p101 = scmp.eq.s32.totalorder %s35, 0
      %p102 = por %p100, %p101
      %s103 = ssub.s32 %s36, %s48
      %s104 = ssub.s32 %s37, %s44
      %s105 = sor.u32 %s103, %s104
      %p106 = scmp.eq.s32.totalorder %s105, 0
      %s108 = sadd.s32 %s107, 1
      %s109 = scalar_select %p106, %s107, %s108
      %p112 = pneg %p106
      %p113 = scmp.eq.s32.totalorder %s29, 1
      %p114 = por %p112, %p113
      %p115 = scmp.ne.s32.totalorder %s107, %s110
      %p116 = scmp.eq.s32.totalorder %s29, 0
      %p117 = por %p115, %p116
      %p118 = scmp.ne.s32.totalorder %s107, %s110
      %p119 = scmp.eq.s32.totalorder %s34, 1
      %p120 = por %p118, %p119
      %p121 = scmp.ne.s32.totalorder %s110, %s111
      %p122 = scmp.eq.s32.totalorder %s34, 0
      %p123 = por %p121, %p122
      %p124 = scmp.ne.s32.totalorder %s110, %s111
      %p125 = scmp.eq.s32.totalorder %s35, 1
      %p126 = por %p124, %p125
      %p128 = scmp.ne.s32.totalorder %s111, %s127
      %p129 = scmp.eq.s32.totalorder %s35, 0
      %p130 = por %p128, %p129
      %s131 = ssub.s32 %s37, %s44
      %p132 = scmp.eq.s32.totalorder %s131, 0
      %s134 = sadd.s32 %s133, 1
      %s135 = scalar_select %p132, %s133, %s134
      %p138 = pneg %p132
      %p139 = scmp.eq.s32.totalorder %s29, 1
      %p140 = por %p138, %p139
      %p141 = scmp.ne.s32.totalorder %s133, %s136
      %p142 = scmp.eq.s32.totalorder %s29, 0
      %p143 = por %p141, %p142
      %p144 = scmp.ne.s32.totalorder %s133, %s136
      %p145 = scmp.eq.s32.totalorder %s34, 1
      %p146 = por %p144, %p145
      %p147 = scmp.ne.s32.totalorder %s136, %s137
      %p148 = scmp.eq.s32.totalorder %s34, 0
      %p149 = por %p147, %p148
      %p150 = scmp.ne.s32.totalorder %s136, %s137
      %p151 = scmp.eq.s32.totalorder %s35, 1
      %p152 = por %p150, %p151
      %p154 = scmp.ne.s32.totalorder %s137, %s153
      %p155 = scmp.eq.s32.totalorder %s35, 0
      %p156 = por %p154, %p155
      %s158 = sadd.s32 %s157, 1
      %p161 = scmp.eq.s32.totalorder %s29, 1
      %p162 = scmp.ne.s32.totalorder %s157, %s159
      %p163 = scmp.eq.s32.totalorder %s29, 0
      %p164 = por %p162, %p163
      %p165 = scmp.ne.s32.totalorder %s157, %s159
      %p166 = scmp.eq.s32.totalorder %s34, 1
      %p167 = por %p165, %p166
      %p168 = scmp.ne.s32.totalorder %s159, %s160
      %p169 = scmp.eq.s32.totalorder %s34, 0
      %p170 = por %p168, %p169
      %p171 = scmp.ne.s32.totalorder %s159, %s160
      %p172 = scmp.eq.s32.totalorder %s35, 1
      %p173 = por %p171, %p172
      %p175 = scmp.ne.s32.totalorder %s160, %s174
      %p176 = scmp.eq.s32.totalorder %s35, 0
      %p177 = por %p175, %p176
      %s179 = sadd.s32 %s178, 1
      %p182 = scmp.eq.s32.totalorder %s29, 1
      %p183 = scmp.ne.s32.totalorder %s178, %s180
      %p184 = scmp.eq.s32.totalorder %s29, 0
      %p185 = por %p183, %p184
      %p186 = scmp.ne.s32.totalorder %s178, %s180
      %p187 = scmp.eq.s32.totalorder %s34, 1
      %p188 = por %p186, %p187
      %p189 = scmp.ne.s32.totalorder %s180, %s181
      %p190 = scmp.eq.s32.totalorder %s34, 0
      %p191 = por %p189, %p190
      %p192 = scmp.ne.s32.totalorder %s180, %s181
      %p193 = scmp.eq.s32.totalorder %s35, 1
      %p194 = por %p192, %p193
      %p196 = scmp.ne.s32.totalorder %s181, %s195
      %p197 = scmp.eq.s32.totalorder %s35, 0
      %p198 = por %p196, %p197
      %s200 = sadd.s32 %s199, 1
      %p203 = scmp.eq.s32.totalorder %s29, 1
      %p204 = scmp.ne.s32.totalorder %s199, %s201
      %p205 = scmp.eq.s32.totalorder %s29, 0
      %p206 = por %p204, %p205
      %p207 = scmp.ne.s32.totalorder %s199, %s201
      %p208 = scmp.eq.s32.totalorder %s34, 1
      %p209 = por %p207, %p208
      %p210 = scmp.ne.s32.totalorder %s201, %s202
      %p211 = scmp.eq.s32.totalorder %s34, 0
      %p212 = por %p210, %p211
      %p213 = scmp.ne.s32.totalorder %s201, %s202
      %p214 = scmp.eq.s32.totalorder %s35, 1
      %p215 = por %p213, %p214
      %p217 = scmp.ne.s32.totalorder %s202, %s216
      %p218 = scmp.eq.s32.totalorder %s35, 0
      %p219 = por %p217, %p218
      %s221 = sadd.s32 %s220, 1
      %p224 = scmp.eq.s32.totalorder %s29, 1
      %p225 = scmp.ne.s32.totalorder %s220, %s222
      %p226 = scmp.eq.s32.totalorder %s29, 0
      %p227 = por %p225, %p226
      %p228 = scmp.ne.s32.totalorder %s220, %s222
      %p229 = scmp.eq.s32.totalorder %s34, 1
      %p230 = por %p228, %p229
      %p231 = scmp.ne.s32.totalorder %s222, %s223
      %p232 = scmp.eq.s32.totalorder %s34, 0
      %p233 = por %p231, %p232
      %p234 = scmp.ne.s32.totalorder %s222, %s223
      %p235 = scmp.eq.s32.totalorder %s35, 1
      %p236 = por %p234, %p235
      %p238 = scmp.ne.s32.totalorder %s223, %s237
      %p239 = scmp.eq.s32.totalorder %s35, 0
      %p240 = por %p238, %p239
      %s242 = sadd.s32 %s241, 1
      %p245 = scmp.eq.s32.totalorder %s29, 1
      %p246 = scmp.ne.s32.totalorder %s241, %s243
      %p247 = scmp.eq.s32.totalorder %s29, 0
      %p248 = por %p246, %p247
      %p249 = scmp.ne.s32.totalorder %s241, %s243
      %p250 = scmp.eq.s32.totalorder %s34, 1
      %p251 = por %p249, %p250
      %p252 = scmp.ne.s32.totalorder %s243, %s244
      %p253 = scmp.eq.s32.totalorder %s34, 0
      %p254 = por %p252, %p253
      %p255 = scmp.ne.s32.totalorder %s243, %s244
      %p256 = scmp.eq.s32.totalorder %s35, 1
      %p257 = por %p255, %p256
      %p259 = scmp.ne.s32.totalorder %s244, %s258
      %p260 = scmp.eq.s32.totalorder %s35, 0
      %p261 = por %p259, %p260
      %s263 = sadd.s32 %s262, 1
      %p266 = scmp.eq.s32.totalorder %s29, 1
      %p267 = scmp.ne.s32.totalorder %s262, %s264
      %p268 = scmp.eq.s32.totalorder %s29, 0
      %p269 = por %p267, %p268
      %p270 = scmp.ne.s32.totalorder %s262, %s264
      %p271 = scmp.eq.s32.totalorder %s34, 1
      %p272 = por %p270, %p271
      %p273 = scmp.ne.s32.totalorder %s264, %s265
      %p274 = scmp.eq.s32.totalorder %s34, 0
      %p275 = por %p273, %p274
      %p276 = scmp.ne.s32.totalorder %s264, %s265
      %p277 = scmp.eq.s32.totalorder %s35, 1
      %p278 = por %p276, %p277
      %p280 = scmp.ne.s32.totalorder %s265, %s279
      %p281 = scmp.eq.s32.totalorder %s35, 0
      %p282 = por %p280, %p281
      %s284 = sadd.s32 %s283, 1
      %p287 = scmp.eq.s32.totalorder %s29, 1
      %p288 = scmp.ne.s32.totalorder %s283, %s285
      %p289 = scmp.eq.s32.totalorder %s29, 0
      %p290 = por %p288, %p289
      %p291 = scmp.ne.s32.totalorder %s283, %s285
      %p292 = scmp.eq.s32.totalorder %s34, 1
      %p293 = por %p291, %p292
      %p294 = scmp.ne.s32.totalorder %s285, %s286
      %p295 = scmp.eq.s32.totalorder %s34, 0
      %p296 = por %p294, %p295
      %p297 = scmp.ne.s32.totalorder %s285, %s286
      %p298 = scmp.eq.s32.totalorder %s35, 1
      %p299 = por %p297, %p298
      %p301 = scmp.ne.s32.totalorder %s286, %s300
      %p302 = scmp.eq.s32.totalorder %s35, 0
      %p303 = por %p301, %p302
      %s304 = ssub.s32 %s36, %s48
      %s305 = ssub.s32 %s37, %s44
      %s306 = sor.u32 %s304, %s305
      %p307 = scmp.eq.s32.totalorder %s306, 0
      %s309 = sadd.s32 %s308, 1
      %s310 = scalar_select %p307, %s308, %s309
      %p313 = pneg %p307
      %p314 = scmp.eq.s32.totalorder %s29, 1
      %p315 = por %p313, %p314
      %p316 = scmp.ne.s32.totalorder %s308, %s311
      %p317 = scmp.eq.s32.totalorder %s29, 0
      %p318 = por %p316, %p317
      %p319 = scmp.ne.s32.totalorder %s308, %s311
      %p320 = scmp.eq.s32.totalorder %s34, 1
      %p321 = por %p319, %p320
      %p322 = scmp.ne.s32.totalorder %s311, %s312
      %p323 = scmp.eq.s32.totalorder %s34, 0
      %p324 = por %p322, %p323
      %p325 = scmp.ne.s32.totalorder %s311, %s312
      %p326 = scmp.eq.s32.totalorder %s35, 1
      %p327 = por %p325, %p326
      %p329 = scmp.ne.s32.totalorder %s312, %s328
      %p330 = scmp.eq.s32.totalorder %s35, 0
      %p331 = por %p329, %p330
      %p332 = scmp.le.s32.totalorder 1, %s29
      %p333 = scmp.lt.s32.totalorder %s29, 3
      %p334 = pnand %p332, %p333
      %p335 = pneg %p334
      // Predicated region
      $region9: #{tpu_custom_call.1} parent=5 // pred_check
        _
      $region10: #{tpu_custom_call.1} parent=5 // pred_check_branch
        %337 = sbr.rel (%p334) target = $region12
      $region11: #{tpu_custom_call.1} parent=5 // pred_region
        %s338 = ssub.s32 %s29, 1
        // Predicated region
        $region13: #{tpu_custom_call.1} parent=11 // pred_check
          %p339 = pneg %p149
        $region14: #{tpu_custom_call.1} parent=11 // pred_check_branch
          %341 = sbr.rel (%p339) target = $region16
        $region15: #{tpu_custom_call.1} parent=11 // pred_region
          %s343 = ssub.s32 512, 512
          %344 = vsyncadd [#allocation11], %s343
          %s345 = smul.addr %s39, 128
          %s346 = scalar_lea.hbm %s3, %s345
          %s347 = sshll.u32 [#allocation10], 4
          %s348 = int_to_ptr.vmem [resolvable:$true] %s347
          %353 = dma.hbm_to_vmem [thread:$0]  %s346, 512, %s348, [#allocation11], 128, 128, 8
        $region16: #{tpu_custom_call.1} parent=11 // pred_fallthru
          _
        // Predicated region
        $region17: #{tpu_custom_call.1} parent=11 // pred_check
          %p354 = pneg %p170
        $region18: #{tpu_custom_call.1} parent=11 // pred_check_branch
          %356 = sbr.rel (%p354) target = $region20
        $region19: #{tpu_custom_call.1} parent=11 // pred_region
          %s358 = ssub.s32 256, 256
          %359 = vsyncadd [#allocation11], %s358
          %s360 = sshll.u32 [#allocation12], 4
          %s361 = int_to_ptr.vmem [resolvable:$true] %s360
          %366 = dma.hbm_to_vmem [thread:$0]  %s4, 256, %s361, [#allocation11], 64, 64, 4
        $region20: #{tpu_custom_call.1} parent=11 // pred_fallthru
          _
        // Predicated region
        $region21: #{tpu_custom_call.1} parent=11 // pred_check
          %p367 = pneg %p191
        $region22: #{tpu_custom_call.1} parent=11 // pred_check_branch
          %369 = sbr.rel (%p367) target = $region24
        $region23: #{tpu_custom_call.1} parent=11 // pred_region
          %s371 = ssub.s32 256, 256
          %372 = vsyncadd [#allocation14], %s371
          %s373 = sshll.u32 [#allocation13], 4
          %s374 = int_to_ptr.vmem [resolvable:$true] %s373
          %379 = dma.hbm_to_vmem [thread:$0]  %s5, 256, %s374, [#allocation14], 64, 64, 4
        $region24: #{tpu_custom_call.1} parent=11 // pred_fallthru
          _
        // Predicated region
        $region25: #{tpu_custom_call.1} parent=11 // pred_check
          %p380 = pneg %p212
        $region26: #{tpu_custom_call.1} parent=11 // pred_check_branch
          %382 = sbr.rel (%p380) target = $region28
        $region27: #{tpu_custom_call.1} parent=11 // pred_region
          %s384 = ssub.s32 256, 256
          %385 = vsyncadd [#allocation14], %s384
          %s386 = sshll.u32 [#allocation15], 4
          %s387 = int_to_ptr.vmem [resolvable:$true] %s386
          %392 = dma.hbm_to_vmem [thread:$0]  %s6, 256, %s387, [#allocation14], 64, 64, 4
        $region28: #{tpu_custom_call.1} parent=11 // pred_fallthru
          _
        // Predicated region
        $region29: #{tpu_custom_call.1} parent=11 // pred_check
          %p393 = pneg %p233
        $region30: #{tpu_custom_call.1} parent=11 // pred_check_branch
          %395 = sbr.rel (%p393) target = $region32
        $region31: #{tpu_custom_call.1} parent=11 // pred_region
          %s397 = ssub.s32 256, 256
          %398 = vsyncadd [#allocation17], %s397
          %s399 = sshll.u32 [#allocation16], 4
          %s400 = int_to_ptr.vmem [resolvable:$true] %s399
          %405 = dma.hbm_to_vmem [thread:$0]  %s7, 256, %s400, [#allocation17], 64, 64, 4
        $region32: #{tpu_custom_call.1} parent=11 // pred_fallthru
          _
        // Predicated region
        $region33: #{tpu_custom_call.1} parent=11 // pred_check
          %p406 = pneg %p254
        $region34: #{tpu_custom_call.1} parent=11 // pred_check_branch
          %408 = sbr.rel (%p406) target = $region36
        $region35: #{tpu_custom_call.1} parent=11 // pred_region
          %s410 = ssub.s32 16, 16
          %411 = vsyncadd [#allocation17], %s410
          %s413 = sshll.u32 [#allocation18], 4
          %s414 = int_to_ptr.vmem [resolvable:$true] %s413
          %416 = dma.hbm_to_vmem [thread:$0]  %s8, 16, %s414, [#allocation17]
        $region36: #{tpu_custom_call.1} parent=11 // pred_fallthru
          _
        // Predicated region
        $region37: #{tpu_custom_call.1} parent=11 // pred_check
          %p417 = pneg %p275
        $region38: #{tpu_custom_call.1} parent=11 // pred_check_branch
          %419 = sbr.rel (%p417) target = $region40
        $region39: #{tpu_custom_call.1} parent=11 // pred_region
          _
        $region40: #{tpu_custom_call.1} parent=11 // pred_fallthru
          _
        // Predicated region
        $region41: #{tpu_custom_call.1} parent=11 // pred_check
          %p420 = pneg %p296
        $region42: #{tpu_custom_call.1} parent=11 // pred_check_branch
          %422 = sbr.rel (%p420) target = $region44
        $region43: #{tpu_custom_call.1} parent=11 // pred_region
          _
        $region44: #{tpu_custom_call.1} parent=11 // pred_fallthru
          _
      $region12: #{tpu_custom_call.1} parent=5 // pred_fallthru
        _
      %p423 = scmp.lt.s32.totalorder %s29, 2
      // Predicated region
      $region45: #{tpu_custom_call.1} parent=5 // pred_check
        %p424 = pneg %p423
      $region46: #{tpu_custom_call.1} parent=5 // pred_check_branch
        %426 = sbr.rel (%p424) target = $region48
      $region47: #{tpu_custom_call.1} parent=5 // pred_region
        // Predicated region
        $region49: #{tpu_custom_call.1} parent=47 // pred_check
          %p427 = pneg %p63
        $region50: #{tpu_custom_call.1} parent=47 // pred_check_branch
          %429 = sbr.rel (%p427) target = $region52
        $region51: #{tpu_custom_call.1} parent=47 // pred_region
          %s430 = sand.u32 %s53, 1
          %s431 = scalar_lea.sflag [#allocation5], %s430
          %s432 = sand.u32 %s53, 1
          %s433 = smul.addr %s432, 4
          %s434 = scalar_lea.vmem [#allocation4], %s433
          %s436 = ssub.s32 64, 64
          %437 = vsyncadd %s431, %s436
          %s438 = sadd.s32 %s37, %s36
          %s439 = smul.addr %s438, 64
          %s440 = scalar_lea.hbm %s0, %s439
          %s442 = sshll.u32 %s434, 4
          %s443 = int_to_ptr.vmem [resolvable:$true] %s442
          %445 = dma.hbm_to_vmem [thread:$0]  %s440, 64, %s443, %s431
        $region52: #{tpu_custom_call.1} parent=47 // pred_fallthru
          _
        // Predicated region
        $region53: #{tpu_custom_call.1} parent=47 // pred_check
          %p446 = pneg %p89
        $region54: #{tpu_custom_call.1} parent=47 // pred_check_branch
          %448 = sbr.rel (%p446) target = $region56
        $region55: #{tpu_custom_call.1} parent=47 // pred_region
          %s449 = sand.u32 %s29, 1
          %s450 = scalar_lea.sflag [#allocation8], %s449
          %s451 = sand.u32 %s79, 1
          %s452 = smul.addr %s451, 4
          %s453 = scalar_lea.vmem [#allocation7], %s452
          %s455 = ssub.s32 64, 64
          %456 = vsyncadd %s450, %s455
          %s457 = smul.addr %s36, 64
          %s458 = scalar_lea.hbm %s1, %s457
          %s460 = sshll.u32 %s453, 4
          %s461 = int_to_ptr.vmem [resolvable:$true] %s460
          %463 = dma.hbm_to_vmem [thread:$0]  %s458, 64, %s461, %s450
        $region56: #{tpu_custom_call.1} parent=47 // pred_fallthru
          _
        // Predicated region
        $region57: #{tpu_custom_call.1} parent=47 // pred_check
          %p464 = pneg %p117
        $region58: #{tpu_custom_call.1} parent=47 // pred_check_branch
          %466 = sbr.rel (%p464) target = $region60
        $region59: #{tpu_custom_call.1} parent=47 // pred_region
          %s467 = sand.u32 %s29, 1
          %s468 = scalar_lea.sflag [#allocation8], %s467
          %s469 = sand.u32 %s107, 1
          %s470 = smul.addr %s469, 8
          %s471 = scalar_lea.vmem [#allocation9], %s470
          %s473 = ssub.s32 128, 128
          %474 = vsyncadd %s468, %s473
          %s475 = sadd.s32 %s37, %s36
          %s476 = smul.addr %s475, 128
          %s477 = scalar_lea.hbm %s2, %s476
          %s479 = sshll.u32 %s471, 4
          %s480 = int_to_ptr.vmem [resolvable:$true] %s479
          %482 = dma.hbm_to_vmem [thread:$0]  %s477, 128, %s480, %s468
        $region60: #{tpu_custom_call.1} parent=47 // pred_fallthru
          _
      $region48: #{tpu_custom_call.1} parent=5 // pred_fallthru
        _
      %p483 = scmp.le.s32.totalorder 1, %s29
      %p484 = scmp.lt.s32.totalorder %s29, 3
      %p485 = pnand %p483, %p484
      %p486 = pneg %p485
      // Predicated region
      $region61: #{tpu_custom_call.1} parent=5 // pred_check
        _
      $region62: #{tpu_custom_call.1} parent=5 // pred_check_branch
        %488 = sbr.rel (%p485) target = $region64
      $region63: #{tpu_custom_call.1} parent=5 // pred_region
        %s489 = ssub.s32 %s29, 1
        %s490 = sand.u32 %s56, 1
        %s491 = scalar_lea.sflag [#allocation5], %s490
        %s492 = sand.u32 %s56, 1
        %s493 = smul.addr %s492, 4
        %s494 = scalar_lea.vmem [#allocation4], %s493
        // Predicated region
        $region65: #{tpu_custom_call.1} parent=63 // pred_check
          %p495 = pneg %p69
        $region66: #{tpu_custom_call.1} parent=63 // pred_check_branch
          %497 = sbr.rel (%p495) target = $region68
        $region67: #{tpu_custom_call.1} parent=63 // pred_region
          %498 = dma.done %s491, 64
        $region68: #{tpu_custom_call.1} parent=63 // pred_fallthru
          _
        %s499 = sand.u32 %s34, 1
        %s500 = scalar_lea.sflag [#allocation8], %s499
        %s501 = sand.u32 %s82, 1
        %s502 = smul.addr %s501, 4
        %s503 = scalar_lea.vmem [#allocation7], %s502
        // Predicated region
        $region69: #{tpu_custom_call.1} parent=63 // pred_check
          %p504 = pneg %p95
        $region70: #{tpu_custom_call.1} parent=63 // pred_check_branch
          %506 = sbr.rel (%p504) target = $region72
        $region71: #{tpu_custom_call.1} parent=63 // pred_region
          %507 = dma.done %s500, 64
        $region72: #{tpu_custom_call.1} parent=63 // pred_fallthru
          _
        %s508 = sand.u32 %s34, 1
        %s509 = scalar_lea.sflag [#allocation8], %s508
        %s510 = sand.u32 %s110, 1
        %s511 = smul.addr %s510, 8
        %s512 = scalar_lea.vmem [#allocation9], %s511
        // Predicated region
        $region73: #{tpu_custom_call.1} parent=63 // pred_check
          %p513 = pneg %p123
        $region74: #{tpu_custom_call.1} parent=63 // pred_check_branch
          %515 = sbr.rel (%p513) target = $region76
        $region75: #{tpu_custom_call.1} parent=63 // pred_region
          %516 = dma.done %s509, 128
        $region76: #{tpu_custom_call.1} parent=63 // pred_fallthru
          _
        // Predicated region
        $region77: #{tpu_custom_call.1} parent=63 // pred_check
          %p517 = pneg %p149
        $region78: #{tpu_custom_call.1} parent=63 // pred_check_branch
          %519 = sbr.rel (%p517) target = $region80
        $region79: #{tpu_custom_call.1} parent=63 // pred_region
          %520 = dma.done [#allocation11], 512
        $region80: #{tpu_custom_call.1} parent=63 // pred_fallthru
          _
        // Predicated region
        $region81: #{tpu_custom_call.1} parent=63 // pred_check
          %p521 = pneg %p170
        $region82: #{tpu_custom_call.1} parent=63 // pred_check_branch
          %523 = sbr.rel (%p521) target = $region84
        $region83: #{tpu_custom_call.1} parent=63 // pred_region
          %524 = dma.done [#allocation11], 256
        $region84: #{tpu_custom_call.1} parent=63 // pred_fallthru
          _
        // Predicated region
        $region85: #{tpu_custom_call.1} parent=63 // pred_check
          %p525 = pneg %p191
        $region86: #{tpu_custom_call.1} parent=63 // pred_check_branch
          %527 = sbr.rel (%p525) target = $region88
        $region87: #{tpu_custom_call.1} parent=63 // pred_region
          %528 = dma.done [#allocation14], 256
        $region88: #{tpu_custom_call.1} parent=63 // pred_fallthru
          _
        // Predicated region
        $region89: #{tpu_custom_call.1} parent=63 // pred_check
          %p529 = pneg %p212
        $region90: #{tpu_custom_call.1} parent=63 // pred_check_branch
          %531 = sbr.rel (%p529) target = $region92
        $region91: #{tpu_custom_call.1} parent=63 // pred_region
          %532 = dma.done [#allocation14], 256
        $region92: #{tpu_custom_call.1} parent=63 // pred_fallthru
          _
        // Predicated region
        $region93: #{tpu_custom_call.1} parent=63 // pred_check
          %p533 = pneg %p233
        $region94: #{tpu_custom_call.1} parent=63 // pred_check_branch
          %535 = sbr.rel (%p533) target = $region96
        $region95: #{tpu_custom_call.1} parent=63 // pred_region
          %536 = dma.done [#allocation17], 256
        $region96: #{tpu_custom_call.1} parent=63 // pred_fallthru
          _
        // Predicated region
        $region97: #{tpu_custom_call.1} parent=63 // pred_check
          %p537 = pneg %p254
        $region98: #{tpu_custom_call.1} parent=63 // pred_check_branch
          %539 = sbr.rel (%p537) target = $region100
        $region99: #{tpu_custom_call.1} parent=63 // pred_region
          %540 = dma.done [#allocation17], 16
        $region100: #{tpu_custom_call.1} parent=63 // pred_fallthru
          _
        %s541 = sand.u32 %s56, 1
        %s542 = scalar_lea.sflag [#allocation5], %s541
        %s543 = sand.u32 %s56, 1
        %s544 = smul.addr %s543, 4
        %s545 = scalar_lea.vmem [#allocation4], %s544
        %p546 = pneg %p69
        %p547 = pneg %p66
        %s548 = sand.u32 %s34, 1
        %s549 = scalar_lea.sflag [#allocation8], %s548
        %s550 = sand.u32 %s82, 1
        %s551 = smul.addr %s550, 4
        %s552 = scalar_lea.vmem [#allocation7], %s551
        %p553 = pneg %p95
        %p554 = pneg %p92
        %s555 = sand.u32 %s34, 1
        %s556 = scalar_lea.sflag [#allocation8], %s555
        %s557 = sand.u32 %s110, 1
        %s558 = smul.addr %s557, 8
        %s559 = scalar_lea.vmem [#allocation9], %s558
        %p560 = pneg %p123
        %p561 = pneg %p120
        %p562 = pneg %p149
        %p563 = pneg %p146
        %p564 = pneg %p170
        %p565 = pneg %p167
        %p566 = pneg %p191
        %p567 = pneg %p188
        %p568 = pneg %p212
        %p569 = pneg %p209
        %p570 = pneg %p233
        %p571 = pneg %p230
        %p572 = pneg %p254
        %p573 = pneg %p251
        %p574 = pneg %p275
        %p575 = pneg %p272
        %p576 = pneg %p296
        %p577 = pneg %p293
        %p578 = pneg %p324
        %p579 = pneg %p321
        %s580 = sand.u32 %s311, 1
        %s581 = scalar_lea.sflag [#allocation6], %s580
        %s582 = sand.u32 %s311, 1
        %s583 = smul.addr %s582, 8
        %s584 = scalar_lea.vmem [#allocation19], %s583
        %p586 = scmp.eq.s32.totalorder %s39, 0
        // Predicated region
        $region101: #{tpu_custom_call.1} parent=63 // pred_check
          %p587 = pneg %p586
        $region102: #{tpu_custom_call.1} parent=63 // pred_check_branch
          %589 = sbr.rel (%p587) target = $region104
        $region103: #{tpu_custom_call.1} parent=63 // pred_region
          %v590 = vld [vmem:[%s503] sm:$0xf]
          %v591 = vld [vmem:[#allocation13] sm:$0xf]
          %v592 = vld [vmem:[#allocation13 + $0x4] sm:$0xf]
          %v593 = vld [vmem:[#allocation13 + $0x8] sm:$0xf]
          %v594 = vld [vmem:[#allocation13 + $0xc] sm:$0xf]
          %v599 = vunpack.c.l.b16 %v591
          %v600 = vunpack.c.l.b16 %v592
          %v601 = vunpack.c.l.b16 %v593
          %v602 = vunpack.c.l.b16 %v594
          %v603 = vpack.c.b16 %v600, %v599
          %v604 = vpack.c.b16 %v602, %v601
          %vm607 = vcmask 261120
          %v609 = vsel %vm607, %v590, 0
          %611 = vmatprep.subr.bf16.mxu0 0
          %612 = vmatpush1.bf16.msra.mxu0 0
          %613 = vmatprep.subr.bf16.mxu0 0
          %614 = vmatpush1.bf16.msra.mxu0 0
          %615 = vmatprep.subr.bf16.mxu0 0
          %616 = vmatpush1.bf16.msra.mxu0 0
          %617 = vmatprep.subr.bf16.mxu0 0
          %618 = vmatpush1.bf16.msra.mxu0 0
          %619 = vmatprep.subr.bf16.mxu0 0
          %620 = vmatpush1.bf16.msra.mxu0 0
          %621 = vmatprep.subr.bf16.mxu0 0
          %622 = vmatpush1.bf16.msra.mxu0 0
          %623 = vmatprep.subr.bf16.mxu0 0
          %624 = vmatpush1.bf16.msra.mxu0 %v604
          %625 = vmatprep.subr.bf16.mxu0 0
          %626 = vmatpush1.bf16.msra.mxu0 %v603
          %627 = vmatprep.subr.bf16.mxu0 0
          %628 = vmatpush2.bf16.msra.mxu0 0
          %629 = vmatprep.subr.bf16.mxu0 0
          %630 = vmatpush2.bf16.msra.mxu0 0
          %631 = vmatprep.subr.bf16.mxu0 0
          %632 = vmatpush2.bf16.msra.mxu0 0
          %633 = vmatprep.subr.bf16.mxu0 0
          %634 = vmatpush2.bf16.msra.mxu0 0
          %635 = vmatprep.subr.bf16.mxu0 0
          %636 = vmatpush2.bf16.msra.mxu0 0
          %637 = vmatprep.subr.bf16.mxu0 0
          %638 = vmatpush2.bf16.msra.mxu0 0
          %639 = vmatprep.subr.bf16.mxu0 0
          %640 = vmatpush2.bf16.msra.mxu0 0
          %641 = vmatprep.subr.bf16.mxu0 0
          %642 = vmatpush2.bf16.msra.mxu0 0
          %643 = vmatprep.mubr.bf16.mxu0 0
          %644 = vmatmul.mubr.bf16.gmra.mxu0 %v609
          %v645 = vpop.f32.mrf.mxu0
          %v646 = vadd.f32 0.0, %v645
          %v647 = vpop.f32.mrf.mxu0
          %v648 = vpop.f32.mrf.mxu0
          %v649 = vpop.f32.mrf.mxu0
          %650 = vdwg.mxu0
          %v651 = vpack.c.bf16 %v646, %v646
          %vm652 = vcmask 257024
          %653 = vst.msk [vmem:[#allocation2] sm:$0xf] %vm652, %v651
          %v654 = vld [vmem:[#allocation15] sm:$0xf]
          %v655 = vld [vmem:[#allocation15 + $0x4] sm:$0xf]
          %v656 = vld [vmem:[#allocation15 + $0x8] sm:$0xf]
          %v657 = vld [vmem:[#allocation15 + $0xc] sm:$0xf]
          %v662 = vunpack.c.l.b16 %v654
          %v663 = vunpack.c.l.b16 %v655
          %v664 = vunpack.c.l.b16 %v656
          %v665 = vunpack.c.l.b16 %v657
          %v666 = vpack.c.b16 %v663, %v662
          %v667 = vpack.c.b16 %v665, %v664
          %670 = vmatprep.subr.bf16.mxu0 0
          %671 = vmatpush1.bf16.msra.mxu0 0
          %672 = vmatprep.subr.bf16.mxu0 0
          %673 = vmatpush1.bf16.msra.mxu0 0
          %674 = vmatprep.subr.bf16.mxu0 0
          %675 = vmatpush1.bf16.msra.mxu0 0
          %676 = vmatprep.subr.bf16.mxu0 0
          %677 = vmatpush1.bf16.msra.mxu0 0
          %678 = vmatprep.subr.bf16.mxu0 0
          %679 = vmatpush1.bf16.msra.mxu0 0
          %680 = vmatprep.subr.bf16.mxu0 0
          %681 = vmatpush1.bf16.msra.mxu0 0
          %682 = vmatprep.subr.bf16.mxu0 0
          %683 = vmatpush1.bf16.msra.mxu0 %v667
          %684 = vmatprep.subr.bf16.mxu0 0
          %685 = vmatpush1.bf16.msra.mxu0 %v666
          %686 = vmatprep.subr.bf16.mxu0 0
          %687 = vmatpush2.bf16.msra.mxu0 0
          %688 = vmatprep.subr.bf16.mxu0 0
          %689 = vmatpush2.bf16.msra.mxu0 0
          %690 = vmatprep.subr.bf16.mxu0 0
          %691 = vmatpush2.bf16.msra.mxu0 0
          %692 = vmatprep.subr.bf16.mxu0 0
          %693 = vmatpush2.bf16.msra.mxu0 0
          %694 = vmatprep.subr.bf16.mxu0 0
          %695 = vmatpush2.bf16.msra.mxu0 0
          %696 = vmatprep.subr.bf16.mxu0 0
          %697 = vmatpush2.bf16.msra.mxu0 0
          %698 = vmatprep.subr.bf16.mxu0 0
          %699 = vmatpush2.bf16.msra.mxu0 0
          %700 = vmatprep.subr.bf16.mxu0 0
          %701 = vmatpush2.bf16.msra.mxu0 0
          %702 = vmatprep.mubr.bf16.mxu0 0
          %703 = vmatmul.mubr.bf16.gmra.mxu0 %v609
          %v704 = vpop.f32.mrf.mxu0
          %v705 = vadd.f32 0.0, %v704
          %v706 = vpop.f32.mrf.mxu0
          %v707 = vpop.f32.mrf.mxu0
          %v708 = vpop.f32.mrf.mxu0
          %709 = vdwg.mxu0
          %v710 = vpack.c.bf16 %v705, %v705
          %711 = vst.msk [vmem:[#allocation3] sm:$0xf] %vm652, %v710
        $region104: #{tpu_custom_call.1} parent=63 // pred_fallthru
          _
        %v712 = vld [vmem:[%s494] sm:$0xf]
        %v713 = vld [vmem:[#allocation12] sm:$0xf]
        %v714 = vld [vmem:[#allocation12 + $0x4] sm:$0xf]
        %v715 = vld [vmem:[#allocation12 + $0x8] sm:$0xf]
        %v716 = vld [vmem:[#allocation12 + $0xc] sm:$0xf]
        %v721 = vunpack.c.l.b16 %v713
        %v722 = vunpack.c.l.b16 %v714
        %v723 = vunpack.c.l.b16 %v715
        %v724 = vunpack.c.l.b16 %v716
        %v725 = vpack.c.b16 %v722, %v721
        %v726 = vpack.c.b16 %v724, %v723
        %vm729 = vcmask 261120
        %v731 = vsel %vm729, %v712, 0
        %733 = vmatprep.subr.bf16.mxu0 0
        %734 = vmatpush1.bf16.msra.mxu0 0
        %735 = vmatprep.subr.bf16.mxu0 0
        %736 = vmatpush1.bf16.msra.mxu0 0
        %737 = vmatprep.subr.bf16.mxu0 0
        %738 = vmatpush1.bf16.msra.mxu0 0
        %739 = vmatprep.subr.bf16.mxu0 0
        %740 = vmatpush1.bf16.msra.mxu0 0
        %741 = vmatprep.subr.bf16.mxu0 0
        %742 = vmatpush1.bf16.msra.mxu0 0
        %743 = vmatprep.subr.bf16.mxu0 0
        %744 = vmatpush1.bf16.msra.mxu0 0
        %745 = vmatprep.subr.bf16.mxu0 0
        %746 = vmatpush1.bf16.msra.mxu0 %v726
        %747 = vmatprep.subr.bf16.mxu0 0
        %748 = vmatpush1.bf16.msra.mxu0 %v725
        %749 = vmatprep.subr.bf16.mxu0 0
        %750 = vmatpush2.bf16.msra.mxu0 0
        %751 = vmatprep.subr.bf16.mxu0 0
        %752 = vmatpush2.bf16.msra.mxu0 0
        %753 = vmatprep.subr.bf16.mxu0 0
        %754 = vmatpush2.bf16.msra.mxu0 0
        %755 = vmatprep.subr.bf16.mxu0 0
        %756 = vmatpush2.bf16.msra.mxu0 0
        %757 = vmatprep.subr.bf16.mxu0 0
        %758 = vmatpush2.bf16.msra.mxu0 0
        %759 = vmatprep.subr.bf16.mxu0 0
        %760 = vmatpush2.bf16.msra.mxu0 0
        %761 = vmatprep.subr.bf16.mxu0 0
        %762 = vmatpush2.bf16.msra.mxu0 0
        %763 = vmatprep.subr.bf16.mxu0 0
        %764 = vmatpush2.bf16.msra.mxu0 0
        %765 = vmatprep.mubr.bf16.mxu0 0
        %766 = vmatmul.mubr.bf16.gmra.mxu0 %v731
        %v767 = vpop.f32.mrf.mxu0
        %v768 = vadd.f32 0.0, %v767
        %v769 = vpop.f32.mrf.mxu0
        %v770 = vpop.f32.mrf.mxu0
        %v771 = vpop.f32.mrf.mxu0
        %772 = vdwg.mxu0
        %v773 = vpack.c.bf16 %v768, %v768
        %v774 = vld [vmem:[#allocation2] sm:$0xf]
        %v775 = vld [vmem:[#allocation3] sm:$0xf]
        %v776 = vld [vmem:[%s512] sm:$0xff]
        %vm777 = vcmask 64512
        %v779 = vsel %vm777, %v773, 0
        %v782 = vsel %vm777, %v774, 0
        %784 = vmatprep.subr.bf16.mxu0 0
        %785 = vmatpush1.bf16.xpose.msra.mxu0 0
        %786 = vmatprep.subr.bf16.mxu0 0
        %787 = vmatpush1.bf16.xpose.msra.mxu0 0
        %788 = vmatprep.subr.bf16.mxu0 0
        %789 = vmatpush1.bf16.xpose.msra.mxu0 0
        %790 = vmatprep.subr.bf16.mxu0 0
        %791 = vmatpush1.bf16.xpose.msra.mxu0 0
        %792 = vmatprep.subr.bf16.mxu0 0
        %793 = vmatpush1.bf16.xpose.msra.mxu0 0
        %794 = vmatprep.subr.bf16.mxu0 0
        %795 = vmatpush1.bf16.xpose.msra.mxu0 0
        %796 = vmatprep.subr.bf16.mxu0 0
        %797 = vmatpush1.bf16.xpose.msra.mxu0 0
        %798 = vmatprep.subr.bf16.mxu0 0
        %799 = vmatpush1.bf16.xpose.msra.mxu0 %v782
        %800 = vmatprep.subr.bf16.mxu0 0
        %801 = vmatpush2.bf16.xpose.msra.mxu0 0
        %802 = vmatprep.subr.bf16.mxu0 0
        %803 = vmatpush2.bf16.xpose.msra.mxu0 0
        %804 = vmatprep.subr.bf16.mxu0 0
        %805 = vmatpush2.bf16.xpose.msra.mxu0 0
        %806 = vmatprep.subr.bf16.mxu0 0
        %807 = vmatpush2.bf16.xpose.msra.mxu0 0
        %808 = vmatprep.subr.bf16.mxu0 0
        %809 = vmatpush2.bf16.xpose.msra.mxu0 0
        %810 = vmatprep.subr.bf16.mxu0 0
        %811 = vmatpush2.bf16.xpose.msra.mxu0 0
        %812 = vmatprep.subr.bf16.mxu0 0
        %813 = vmatpush2.bf16.xpose.msra.mxu0 0
        %814 = vmatprep.subr.bf16.mxu0 0
        %815 = vmatpush2.bf16.xpose.msra.mxu0 0
        %816 = vmatprep.mubr.bf16.mxu0 0
        %817 = vmatmul.mubr.bf16.gmra.mxu0 %v779
        %v818 = vpop.f32.mrf.mxu0
        %v819 = vadd.f32 %v776, %v818
        %v820 = vpop.f32.mrf.mxu0
        %v821 = vpop.f32.mrf.mxu0
        %v822 = vpop.f32.mrf.mxu0
        %823 = vdwg.mxu0
        %v824 = vld [vmem:[#allocation10] sm:$0xff]
        %v825 = vadd.f32 %v819, %v824
        %v826 = vsel %vm777, %v825, -inf
        %827 = vmax.xlane.f32.xlu0 %v826
        %v828 = vpop.xlane.xlu0 %827
        %v829 = vsub.f32 %v825, %v828
        %v830 = vmul.f32 %v829, 1.442695
        %v831 = vpow.pop %v830
        %v832 = vsel %vm777, %v831, 0.0
        %833 = vadd.xlane.f32.xlu0 %v832
        %v834 = vpop.xlane.xlu0 %833
        %v835 = vrcp.pop %v834
        %v836 = vmul.f32 %v831, %v835
        %v837 = vpack.c.bf16 %v836, %v836
        %v839 = vsel %vm777, %v837, 0
        %vm841 = vcmask 1043456
        %v843 = vsel %vm841, %v775, 0
        %845 = vmatprep.subr.bf16.mxu0 0
        %846 = vmatpush1.bf16.msra.mxu0 0
        %847 = vmatprep.subr.bf16.mxu0 0
        %848 = vmatpush1.bf16.msra.mxu0 0
        %849 = vmatprep.subr.bf16.mxu0 0
        %850 = vmatpush1.bf16.msra.mxu0 0
        %851 = vmatprep.subr.bf16.mxu0 0
        %852 = vmatpush1.bf16.msra.mxu0 0
        %853 = vmatprep.subr.bf16.mxu0 0
        %854 = vmatpush1.bf16.msra.mxu0 0
        %855 = vmatprep.subr.bf16.mxu0 0
        %856 = vmatpush1.bf16.msra.mxu0 0
        %857 = vmatprep.subr.bf16.mxu0 0
        %858 = vmatpush1.bf16.msra.mxu0 0
        %859 = vmatprep.subr.bf16.mxu0 0
        %860 = vmatpush1.bf16.msra.mxu0 %v843
        %861 = vmatprep.subr.bf16.mxu0 0
        %862 = vmatpush2.bf16.msra.mxu0 0
        %863 = vmatprep.subr.bf16.mxu0 0
        %864 = vmatpush2.bf16.msra.mxu0 0
        %865 = vmatprep.subr.bf16.mxu0 0
        %866 = vmatpush2.bf16.msra.mxu0 0
        %867 = vmatprep.subr.bf16.mxu0 0
        %868 = vmatpush2.bf16.msra.mxu0 0
        %869 = vmatprep.subr.bf16.mxu0 0
        %870 = vmatpush2.bf16.msra.mxu0 0
        %871 = vmatprep.subr.bf16.mxu0 0
        %872 = vmatpush2.bf16.msra.mxu0 0
        %873 = vmatprep.subr.bf16.mxu0 0
        %874 = vmatpush2.bf16.msra.mxu0 0
        %875 = vmatprep.subr.bf16.mxu0 0
        %876 = vmatpush2.bf16.msra.mxu0 0
        %877 = vmatprep.mubr.bf16.mxu0 0
        %878 = vmatmul.mubr.bf16.gmra.mxu0 %v839
        %v879 = vpop.f32.mrf.mxu0
        %v880 = vadd.f32 0.0, %v879
        %v881 = vpop.f32.mrf.mxu0
        %v882 = vpop.f32.mrf.mxu0
        %v883 = vpop.f32.mrf.mxu0
        %884 = vdwg.mxu0
        %886 = vrot.lane.b32.xlu0 %v773, 120
        %v887 = vpop.permute.xlu0 %886
        %v889 = vunpack.c.l.b16 %v774
        %v890 = vpack.c.b16 %v889, %v889
        %891 = vrot.lane.b32.xlu0 %v890, 120
        %v892 = vpop.permute.xlu0 %891
        %v894 = vsel %vm777, %v887, 0
        %v897 = vsel %vm777, %v892, 0
        %899 = vmatprep.subr.bf16.mxu0 0
        %900 = vmatpush1.bf16.xpose.msra.mxu0 0
        %901 = vmatprep.subr.bf16.mxu0 0
        %902 = vmatpush1.bf16.xpose.msra.mxu0 0
        %903 = vmatprep.subr.bf16.mxu0 0
        %904 = vmatpush1.bf16.xpose.msra.mxu0 0
        %905 = vmatprep.subr.bf16.mxu0 0
        %906 = vmatpush1.bf16.xpose.msra.mxu0 0
        %907 = vmatprep.subr.bf16.mxu0 0
        %908 = vmatpush1.bf16.xpose.msra.mxu0 0
        %909 = vmatprep.subr.bf16.mxu0 0
        %910 = vmatpush1.bf16.xpose.msra.mxu0 0
        %911 = vmatprep.subr.bf16.mxu0 0
        %912 = vmatpush1.bf16.xpose.msra.mxu0 0
        %913 = vmatprep.subr.bf16.mxu0 0
        %914 = vmatpush1.bf16.xpose.msra.mxu0 %v897
        %915 = vmatprep.subr.bf16.mxu0 0
        %916 = vmatpush2.bf16.xpose.msra.mxu0 0
        %917 = vmatprep.subr.bf16.mxu0 0
        %918 = vmatpush2.bf16.xpose.msra.mxu0 0
        %919 = vmatprep.subr.bf16.mxu0 0
        %920 = vmatpush2.bf16.xpose.msra.mxu0 0
        %921 = vmatprep.subr.bf16.mxu0 0
        %922 = vmatpush2.bf16.xpose.msra.mxu0 0
        %923 = vmatprep.subr.bf16.mxu0 0
        %924 = vmatpush2.bf16.xpose.msra.mxu0 0
        %925 = vmatprep.subr.bf16.mxu0 0
        %926 = vmatpush2.bf16.xpose.msra.mxu0 0
        %927 = vmatprep.subr.bf16.mxu0 0
        %928 = vmatpush2.bf16.xpose.msra.mxu0 0
        %929 = vmatprep.subr.bf16.mxu0 0
        %930 = vmatpush2.bf16.xpose.msra.mxu0 0
        %931 = vmatprep.mubr.bf16.mxu0 0
        %932 = vmatmul.mubr.bf16.gmra.mxu0 %v894
        %v933 = vpop.f32.mrf.mxu0
        %v934 = vadd.f32 %v776, %v933
        %v935 = vpop.f32.mrf.mxu0
        %v936 = vpop.f32.mrf.mxu0
        %v937 = vpop.f32.mrf.mxu0
        %938 = vdwg.mxu0
        %s939 = scalar_lea.vmem [#allocation10], 8
        %v940 = vld [vmem:[%s939] sm:$0xff]
        %v941 = vadd.f32 %v934, %v940
        %v942 = vsel %vm777, %v941, -inf
        %943 = vmax.xlane.f32.xlu0 %v942
        %v944 = vpop.xlane.xlu0 %943
        %v945 = vsub.f32 %v941, %v944
        %v946 = vmul.f32 %v945, 1.442695
        %v947 = vpow.pop %v946
        %v948 = vsel %vm777, %v947, 0.0
        %949 = vadd.xlane.f32.xlu0 %v948
        %v950 = vpop.xlane.xlu0 %949
        %v951 = vrcp.pop %v950
        %v952 = vmul.f32 %v947, %v951
        %v953 = vpack.c.bf16 %v952, %v952
        %v955 = vunpack.c.l.b16 %v775
        %v956 = vpack.c.b16 %v955, %v955
        %957 = vrot.lane.b32.xlu0 %v956, 120
        %v958 = vpop.permute.xlu0 %957
        %v960 = vsel %vm777, %v953, 0
        %v963 = vsel %vm841, %v958, 0
        %965 = vmatprep.subr.bf16.mxu0 0
        %966 = vmatpush1.bf16.msra.mxu0 0
        %967 = vmatprep.subr.bf16.mxu0 0
        %968 = vmatpush1.bf16.msra.mxu0 0
        %969 = vmatprep.subr.bf16.mxu0 0
        %970 = vmatpush1.bf16.msra.mxu0 0
        %971 = vmatprep.subr.bf16.mxu0 0
        %972 = vmatpush1.bf16.msra.mxu0 0
        %973 = vmatprep.subr.bf16.mxu0 0
        %974 = vmatpush1.bf16.msra.mxu0 0
        %975 = vmatprep.subr.bf16.mxu0 0
        %976 = vmatpush1.bf16.msra.mxu0 0
        %977 = vmatprep.subr.bf16.mxu0 0
        %978 = vmatpush1.bf16.msra.mxu0 0
        %979 = vmatprep.subr.bf16.mxu0 0
        %980 = vmatpush1.bf16.msra.mxu0 %v963
        %981 = vmatprep.subr.bf16.mxu0 0
        %982 = vmatpush2.bf16.msra.mxu0 0
        %983 = vmatprep.subr.bf16.mxu0 0
        %984 = vmatpush2.bf16.msra.mxu0 0
        %985 = vmatprep.subr.bf16.mxu0 0
        %986 = vmatpush2.bf16.msra.mxu0 0
        %987 = vmatprep.subr.bf16.mxu0 0
        %988 = vmatpush2.bf16.msra.mxu0 0
        %989 = vmatprep.subr.bf16.mxu0 0
        %990 = vmatpush2.bf16.msra.mxu0 0
        %991 = vmatprep.subr.bf16.mxu0 0
        %992 = vmatpush2.bf16.msra.mxu0 0
        %993 = vmatprep.subr.bf16.mxu0 0
        %994 = vmatpush2.bf16.msra.mxu0 0
        %995 = vmatprep.subr.bf16.mxu0 0
        %996 = vmatpush2.bf16.msra.mxu0 0
        %997 = vmatprep.mubr.bf16.mxu0 0
        %998 = vmatmul.mubr.bf16.gmra.mxu0 %v960
        %v999 = vpop.f32.mrf.mxu0
        %v1000 = vadd.f32 0.0, %v999
        %v1001 = vpop.f32.mrf.mxu0
        %v1002 = vpop.f32.mrf.mxu0
        %v1003 = vpop.f32.mrf.mxu0
        %1004 = vdwg.mxu0
        %1005 = vrot.lane.b32.xlu0 %v773, 112
        %v1006 = vpop.permute.xlu0 %1005
        %1007 = vrot.lane.b32.xlu0 %v890, 112
        %v1008 = vpop.permute.xlu0 %1007
        %v1010 = vsel %vm777, %v1006, 0
        %v1013 = vsel %vm777, %v1008, 0
        %1015 = vmatprep.subr.bf16.mxu0 0
        %1016 = vmatpush1.bf16.xpose.msra.mxu0 0
        %1017 = vmatprep.subr.bf16.mxu0 0
        %1018 = vmatpush1.bf16.xpose.msra.mxu0 0
        %1019 = vmatprep.subr.bf16.mxu0 0
        %1020 = vmatpush1.bf16.xpose.msra.mxu0 0
        %1021 = vmatprep.subr.bf16.mxu0 0
        %1022 = vmatpush1.bf16.xpose.msra.mxu0 0
        %1023 = vmatprep.subr.bf16.mxu0 0
        %1024 = vmatpush1.bf16.xpose.msra.mxu0 0
        %1025 = vmatprep.subr.bf16.mxu0 0
        %1026 = vmatpush1.bf16.xpose.msra.mxu0 0
        %1027 = vmatprep.subr.bf16.mxu0 0
        %1028 = vmatpush1.bf16.xpose.msra.mxu0 0
        %1029 = vmatprep.subr.bf16.mxu0 0
        %1030 = vmatpush1.bf16.xpose.msra.mxu0 %v1013
        %1031 = vmatprep.subr.bf16.mxu0 0
        %1032 = vmatpush2.bf16.xpose.msra.mxu0 0
        %1033 = vmatprep.subr.bf16.mxu0 0
        %1034 = vmatpush2.bf16.xpose.msra.mxu0 0
        %1035 = vmatprep.subr.bf16.mxu0 0
        %1036 = vmatpush2.bf16.xpose.msra.mxu0 0
        %1037 = vmatprep.subr.bf16.mxu0 0
        %1038 = vmatpush2.bf16.xpose.msra.mxu0 0
        %1039 = vmatprep.subr.bf16.mxu0 0
        %1040 = vmatpush2.bf16.xpose.msra.mxu0 0
        %1041 = vmatprep.subr.bf16.mxu0 0
        %1042 = vmatpush2.bf16.xpose.msra.mxu0 0
        %1043 = vmatprep.subr.bf16.mxu0 0
        %1044 = vmatpush2.bf16.xpose.msra.mxu0 0
        %1045 = vmatprep.subr.bf16.mxu0 0
        %1046 = vmatpush2.bf16.xpose.msra.mxu0 0
        %1047 = vmatprep.mubr.bf16.mxu0 0
        %1048 = vmatmul.mubr.bf16.gmra.mxu0 %v1010
        %v1049 = vpop.f32.mrf.mxu0
        %v1050 = vadd.f32 %v776, %v1049
        %v1051 = vpop.f32.mrf.mxu0
        %v1052 = vpop.f32.mrf.mxu0
        %v1053 = vpop.f32.mrf.mxu0
        %1054 = vdwg.mxu0
        %s1055 = scalar_lea.vmem [#allocation10], 16
        %v1056 = vld [vmem:[%s1055] sm:$0xff]
        %v1057 = vadd.f32 %v1050, %v1056
        %v1058 = vsel %vm777, %v1057, -inf
        %1059 = vmax.xlane.f32.xlu0 %v1058
        %v1060 = vpop.xlane.xlu0 %1059
        %v1061 = vsub.f32 %v1057, %v1060
        %v1062 = vmul.f32 %v1061, 1.442695
        %v1063 = vpow.pop %v1062
        %v1064 = vsel %vm777, %v1063, 0.0
        %1065 = vadd.xlane.f32.xlu0 %v1064
        %v1066 = vpop.xlane.xlu0 %1065
        %v1067 = vrcp.pop %v1066
        %v1068 = vmul.f32 %v1063, %v1067
        %v1069 = vpack.c.bf16 %v1068, %v1068
        %1070 = vrot.lane.b32.xlu0 %v956, 112
        %v1071 = vpop.permute.xlu0 %1070
        %v1073 = vsel %vm777, %v1069, 0
        %v1076 = vsel %vm841, %v1071, 0
        %1078 = vmatprep.subr.bf16.mxu0 0
        %1079 = vmatpush1.bf16.msra.mxu0 0
        %1080 = vmatprep.subr.bf16.mxu0 0
        %1081 = vmatpush1.bf16.msra.mxu0 0
        %1082 = vmatprep.subr.bf16.mxu0 0
        %1083 = vmatpush1.bf16.msra.mxu0 0
        %1084 = vmatprep.subr.bf16.mxu0 0
        %1085 = vmatpush1.bf16.msra.mxu0 0
        %1086 = vmatprep.subr.bf16.mxu0 0
        %1087 = vmatpush1.bf16.msra.mxu0 0
        %1088 = vmatprep.subr.bf16.mxu0 0
        %1089 = vmatpush1.bf16.msra.mxu0 0
        %1090 = vmatprep.subr.bf16.mxu0 0
        %1091 = vmatpush1.bf16.msra.mxu0 0
        %1092 = vmatprep.subr.bf16.mxu0 0
        %1093 = vmatpush1.bf16.msra.mxu0 %v1076
        %1094 = vmatprep.subr.bf16.mxu0 0
        %1095 = vmatpush2.bf16.msra.mxu0 0
        %1096 = vmatprep.subr.bf16.mxu0 0
        %1097 = vmatpush2.bf16.msra.mxu0 0
        %1098 = vmatprep.subr.bf16.mxu0 0
        %1099 = vmatpush2.bf16.msra.mxu0 0
        %1100 = vmatprep.subr.bf16.mxu0 0
        %1101 = vmatpush2.bf16.msra.mxu0 0
        %1102 = vmatprep.subr.bf16.mxu0 0
        %1103 = vmatpush2.bf16.msra.mxu0 0
        %1104 = vmatprep.subr.bf16.mxu0 0
        %1105 = vmatpush2.bf16.msra.mxu0 0
        %1106 = vmatprep.subr.bf16.mxu0 0
        %1107 = vmatpush2.bf16.msra.mxu0 0
        %1108 = vmatprep.subr.bf16.mxu0 0
        %1109 = vmatpush2.bf16.msra.mxu0 0
        %1110 = vmatprep.mubr.bf16.mxu0 0
        %1111 = vmatmul.mubr.bf16.gmra.mxu0 %v1073
        %v1112 = vpop.f32.mrf.mxu0
        %v1113 = vadd.f32 0.0, %v1112
        %v1114 = vpop.f32.mrf.mxu0
        %v1115 = vpop.f32.mrf.mxu0
        %v1116 = vpop.f32.mrf.mxu0
        %1117 = vdwg.mxu0
        %1118 = vrot.lane.b32.xlu0 %v773, 104
        %v1119 = vpop.permute.xlu0 %1118
        %1120 = vrot.lane.b32.xlu0 %v890, 104
        %v1121 = vpop.permute.xlu0 %1120
        %v1123 = vsel %vm777, %v1119, 0
        %v1126 = vsel %vm777, %v1121, 0
        %1128 = vmatprep.subr.bf16.mxu0 0
        %1129 = vmatpush1.bf16.xpose.msra.mxu0 0
        %1130 = vmatprep.subr.bf16.mxu0 0
        %1131 = vmatpush1.bf16.xpose.msra.mxu0 0
        %1132 = vmatprep.subr.bf16.mxu0 0
        %1133 = vmatpush1.bf16.xpose.msra.mxu0 0
        %1134 = vmatprep.subr.bf16.mxu0 0
        %1135 = vmatpush1.bf16.xpose.msra.mxu0 0
        %1136 = vmatprep.subr.bf16.mxu0 0
        %1137 = vmatpush1.bf16.xpose.msra.mxu0 0
        %1138 = vmatprep.subr.bf16.mxu0 0
        %1139 = vmatpush1.bf16.xpose.msra.mxu0 0
        %1140 = vmatprep.subr.bf16.mxu0 0
        %1141 = vmatpush1.bf16.xpose.msra.mxu0 0
        %1142 = vmatprep.subr.bf16.mxu0 0
        %1143 = vmatpush1.bf16.xpose.msra.mxu0 %v1126
        %1144 = vmatprep.subr.bf16.mxu0 0
        %1145 = vmatpush2.bf16.xpose.msra.mxu0 0
        %1146 = vmatprep.subr.bf16.mxu0 0
        %1147 = vmatpush2.bf16.xpose.msra.mxu0 0
        %1148 = vmatprep.subr.bf16.mxu0 0
        %1149 = vmatpush2.bf16.xpose.msra.mxu0 0
        %1150 = vmatprep.subr.bf16.mxu0 0
        %1151 = vmatpush2.bf16.xpose.msra.mxu0 0
        %1152 = vmatprep.subr.bf16.mxu0 0
        %1153 = vmatpush2.bf16.xpose.msra.mxu0 0
        %1154 = vmatprep.subr.bf16.mxu0 0
        %1155 = vmatpush2.bf16.xpose.msra.mxu0 0
        %1156 = vmatprep.subr.bf16.mxu0 0
        %1157 = vmatpush2.bf16.xpose.msra.mxu0 0
        %1158 = vmatprep.subr.bf16.mxu0 0
        %1159 = vmatpush2.bf16.xpose.msra.mxu0 0
        %1160 = vmatprep.mubr.bf16.mxu0 0
        %1161 = vmatmul.mubr.bf16.gmra.mxu0 %v1123
        %v1162 = vpop.f32.mrf.mxu0
        %v1163 = vadd.f32 %v776, %v1162
        %v1164 = vpop.f32.mrf.mxu0
        %v1165 = vpop.f32.mrf.mxu0
        %v1166 = vpop.f32.mrf.mxu0
        %1167 = vdwg.mxu0
        %s1168 = scalar_lea.vmem [#allocation10], 24
        %v1169 = vld [vmem:[%s1168] sm:$0xff]
        %v1170 = vadd.f32 %v1163, %v1169
        %v1171 = vsel %vm777, %v1170, -inf
        %1172 = vmax.xlane.f32.xlu0 %v1171
        %v1173 = vpop.xlane.xlu0 %1172
        %v1174 = vsub.f32 %v1170, %v1173
        %v1175 = vmul.f32 %v1174, 1.442695
        %v1176 = vpow.pop %v1175
        %v1177 = vsel %vm777, %v1176, 0.0
        %1178 = vadd.xlane.f32.xlu0 %v1177
        %v1179 = vpop.xlane.xlu0 %1178
        %v1180 = vrcp.pop %v1179
        %v1181 = vmul.f32 %v1176, %v1180
        %v1182 = vpack.c.bf16 %v1181, %v1181
        %1183 = vrot.lane.b32.xlu0 %v956, 104
        %v1184 = vpop.permute.xlu0 %1183
        %v1186 = vsel %vm777, %v1182, 0
        %v1189 = vsel %vm841, %v1184, 0
        %1191 = vmatprep.subr.bf16.mxu0 0
        %1192 = vmatpush1.bf16.msra.mxu0 0
        %1193 = vmatprep.subr.bf16.mxu0 0
        %1194 = vmatpush1.bf16.msra.mxu0 0
        %1195 = vmatprep.subr.bf16.mxu0 0
        %1196 = vmatpush1.bf16.msra.mxu0 0
        %1197 = vmatprep.subr.bf16.mxu0 0
        %1198 = vmatpush1.bf16.msra.mxu0 0
        %1199 = vmatprep.subr.bf16.mxu0 0
        %1200 = vmatpush1.bf16.msra.mxu0 0
        %1201 = vmatprep.subr.bf16.mxu0 0
        %1202 = vmatpush1.bf16.msra.mxu0 0
        %1203 = vmatprep.subr.bf16.mxu0 0
        %1204 = vmatpush1.bf16.msra.mxu0 0
        %1205 = vmatprep.subr.bf16.mxu0 0
        %1206 = vmatpush1.bf16.msra.mxu0 %v1189
        %1207 = vmatprep.subr.bf16.mxu0 0
        %1208 = vmatpush2.bf16.msra.mxu0 0
        %1209 = vmatprep.subr.bf16.mxu0 0
        %1210 = vmatpush2.bf16.msra.mxu0 0
        %1211 = vmatprep.subr.bf16.mxu0 0
        %1212 = vmatpush2.bf16.msra.mxu0 0
        %1213 = vmatprep.subr.bf16.mxu0 0
        %1214 = vmatpush2.bf16.msra.mxu0 0
        %1215 = vmatprep.subr.bf16.mxu0 0
        %1216 = vmatpush2.bf16.msra.mxu0 0
        %1217 = vmatprep.subr.bf16.mxu0 0
        %1218 = vmatpush2.bf16.msra.mxu0 0
        %1219 = vmatprep.subr.bf16.mxu0 0
        %1220 = vmatpush2.bf16.msra.mxu0 0
        %1221 = vmatprep.subr.bf16.mxu0 0
        %1222 = vmatpush2.bf16.msra.mxu0 0
        %1223 = vmatprep.mubr.bf16.mxu0 0
        %1224 = vmatmul.mubr.bf16.gmra.mxu0 %v1186
        %v1225 = vpop.f32.mrf.mxu0
        %v1226 = vadd.f32 0.0, %v1225
        %v1227 = vpop.f32.mrf.mxu0
        %v1228 = vpop.f32.mrf.mxu0
        %v1229 = vpop.f32.mrf.mxu0
        %1230 = vdwg.mxu0
        %1232 = vrot.lane.b32.xlu0 %v1000, 8
        %v1233 = vpop.permute.xlu0 %1232
        %1236 = vrot.lane.b32.xlu0 %v1113, 16
        %v1237 = vpop.permute.xlu0 %1236
        %1240 = vrot.lane.b32.xlu0 %v1226, 24
        %v1241 = vpop.permute.xlu0 %1240
        %v1243 = vsel %vm777, %v880, %v1233
        %vm1244 = vcmask 130048
        %v1245 = vsel %vm1244, %v1243, %v1237
        %vm1246 = vcmask 195584
        %v1247 = vsel %vm1246, %v1245, %v1241
        %v1248 = vld [vmem:[#allocation16] sm:$0xf]
        %v1249 = vld [vmem:[#allocation16 + $0x4] sm:$0xf]
        %v1250 = vld [vmem:[#allocation16 + $0x8] sm:$0xf]
        %v1251 = vld [vmem:[#allocation16 + $0xc] sm:$0xf]
        %v1252 = vld [vmem:[#allocation18] sm:$0x1]
        %v1254 = vlaneseq
        %v1255 = vshrl.u32 %v1254, 7
        %v1256 = vsub.s32 0, %v1255
        %v1257 = vrot.slane %v1252, %v1256
        %v1263 = vunpack.c.l.b16 %v1248
        %v1264 = vunpack.c.l.b16 %v1249
        %v1265 = vunpack.c.l.b16 %v1250
        %v1266 = vunpack.c.l.b16 %v1251
        %v1267 = vpack.c.b16 %v1264, %v1263
        %v1268 = vpack.c.b16 %v1266, %v1265
        %1271 = vmatprep.subr.bf16.mxu0 0
        %1272 = vmatpush1.bf16.msra.mxu0 0
        %1273 = vmatprep.subr.bf16.mxu0 0
        %1274 = vmatpush1.bf16.msra.mxu0 0
        %1275 = vmatprep.subr.bf16.mxu0 0
        %1276 = vmatpush1.bf16.msra.mxu0 0
        %1277 = vmatprep.subr.bf16.mxu0 0
        %1278 = vmatpush1.bf16.msra.mxu0 0
        %1279 = vmatprep.subr.bf16.mxu0 0
        %1280 = vmatpush1.bf16.msra.mxu0 0
        %1281 = vmatprep.subr.bf16.mxu0 0
        %1282 = vmatpush1.bf16.msra.mxu0 0
        %1283 = vmatprep.subr.bf16.mxu0 0
        %1284 = vmatpush1.bf16.msra.mxu0 %v1268
        %1285 = vmatprep.subr.bf16.mxu0 0
        %1286 = vmatpush1.bf16.msra.mxu0 %v1267
        %1287 = vmatprep.subr.bf16.mxu0 0
        %1288 = vmatpush2.bf16.msra.mxu0 0
        %1289 = vmatprep.subr.bf16.mxu0 0
        %1290 = vmatpush2.bf16.msra.mxu0 0
        %1291 = vmatprep.subr.bf16.mxu0 0
        %1292 = vmatpush2.bf16.msra.mxu0 0
        %1293 = vmatprep.subr.bf16.mxu0 0
        %1294 = vmatpush2.bf16.msra.mxu0 0
        %1295 = vmatprep.subr.bf16.mxu0 0
        %1296 = vmatpush2.bf16.msra.mxu0 0
        %1297 = vmatprep.subr.bf16.mxu0 0
        %1298 = vmatpush2.bf16.msra.mxu0 0
        %1299 = vmatprep.subr.bf16.mxu0 0
        %1300 = vmatpush2.bf16.msra.mxu0 0
        %1301 = vmatprep.subr.bf16.mxu0 0
        %1302 = vmatpush2.bf16.msra.mxu0 0
        %1303 = vmatprep.mubr.bf16.mxu0 0
        %1304 = vmatmul.mubr.bf16.gmra.mxu0 %v731
        %v1305 = vpop.f32.mrf.mxu0
        %v1306 = vadd.f32 %v1257, %v1305
        %v1307 = vpop.f32.mrf.mxu0
        %v1308 = vpop.f32.mrf.mxu0
        %v1309 = vpop.f32.mrf.mxu0
        %1310 = vdwg.mxu0
        %v1311 = vxor.u32 %v1306, 2147483648
        %v1312 = vmul.f32 %v1311, 1.442695
        %v1313 = vpow.pop %v1312
        %v1314 = vadd.f32 %v1313, 1.0
        %v1315 = vrcp.pop %v1314
        %v1316 = vmul.f32 1.0, %v1315
        %v1317 = vmul.f32 %v1247, %v1316
        %v1318 = vpack.c.bf16 %v1317, %v1317
        %v1319 = vld [vmem:[%s9] sm:$0xf]
        %v1320 = vld [vmem:[%s9 + $0x4] sm:$0xf]
        %v1321 = vld [vmem:[%s9 + $0x8] sm:$0xf]
        %v1322 = vld [vmem:[%s9 + $0xc] sm:$0xf]
        %v1323 = vld [vmem:[%s10] sm:$0x1]
        %v1325 = vlaneseq
        %v1326 = vshrl.u32 %v1325, 7
        %v1327 = vsub.s32 0, %v1326
        %v1328 = vrot.slane %v1323, %v1327
        %v1334 = vunpack.c.l.b16 %v1319
        %v1335 = vunpack.c.l.b16 %v1320
        %v1336 = vunpack.c.l.b16 %v1321
        %v1337 = vunpack.c.l.b16 %v1322
        %v1338 = vpack.c.b16 %v1335, %v1334
        %v1339 = vpack.c.b16 %v1337, %v1336
        %v1343 = vsel %vm729, %v1318, 0
        %1345 = vmatprep.subr.bf16.mxu0 0
        %1346 = vmatpush1.bf16.msra.mxu0 0
        %1347 = vmatprep.subr.bf16.mxu0 0
        %1348 = vmatpush1.bf16.msra.mxu0 0
        %1349 = vmatprep.subr.bf16.mxu0 0
        %1350 = vmatpush1.bf16.msra.mxu0 0
        %1351 = vmatprep.subr.bf16.mxu0 0
        %1352 = vmatpush1.bf16.msra.mxu0 0
        %1353 = vmatprep.subr.bf16.mxu0 0
        %1354 = vmatpush1.bf16.msra.mxu0 0
        %1355 = vmatprep.subr.bf16.mxu0 0
        %1356 = vmatpush1.bf16.msra.mxu0 0
        %1357 = vmatprep.subr.bf16.mxu0 0
        %1358 = vmatpush1.bf16.msra.mxu0 %v1339
        %1359 = vmatprep.subr.bf16.mxu0 0
        %1360 = vmatpush1.bf16.msra.mxu0 %v1338
        %1361 = vmatprep.subr.bf16.mxu0 0
        %1362 = vmatpush2.bf16.msra.mxu0 0
        %1363 = vmatprep.subr.bf16.mxu0 0
        %1364 = vmatpush2.bf16.msra.mxu0 0
        %1365 = vmatprep.subr.bf16.mxu0 0
        %1366 = vmatpush2.bf16.msra.mxu0 0
        %1367 = vmatprep.subr.bf16.mxu0 0
        %1368 = vmatpush2.bf16.msra.mxu0 0
        %1369 = vmatprep.subr.bf16.mxu0 0
        %1370 = vmatpush2.bf16.msra.mxu0 0
        %1371 = vmatprep.subr.bf16.mxu0 0
        %1372 = vmatpush2.bf16.msra.mxu0 0
        %1373 = vmatprep.subr.bf16.mxu0 0
        %1374 = vmatpush2.bf16.msra.mxu0 0
        %1375 = vmatprep.subr.bf16.mxu0 0
        %1376 = vmatpush2.bf16.msra.mxu0 0
        %1377 = vmatprep.mubr.bf16.mxu0 0
        %1378 = vmatmul.mubr.bf16.gmra.mxu0 %v1343
        %v1379 = vpop.f32.mrf.mxu0
        %v1380 = vadd.f32 %v1328, %v1379
        %v1381 = vpop.f32.mrf.mxu0
        %v1382 = vpop.f32.mrf.mxu0
        %v1383 = vpop.f32.mrf.mxu0
        %1384 = vdwg.mxu0
        %1385 = vst.msk [vmem:[%s584] sm:$0xff] %vm729, %v1380
        %s1386 = sand.u32 %s311, 1
        %s1387 = scalar_lea.sflag [#allocation6], %s1386
        %s1388 = sand.u32 %s311, 1
        %s1389 = smul.addr %s1388, 8
        %s1390 = scalar_lea.vmem [#allocation19], %s1389
        // Predicated region
        $region105: #{tpu_custom_call.1} parent=63 // pred_check
          %p1391 = pneg %p321
        $region106: #{tpu_custom_call.1} parent=63 // pred_check_branch
          %1393 = sbr.rel (%p1391) target = $region108
        $region107: #{tpu_custom_call.1} parent=63 // pred_region
          %s1395 = ssub.s32 128, 128
          %1396 = vsyncadd %s1387, %s1395
          %s1397 = sadd.s32 %s39, %s38
          %s1398 = smul.addr %s1397, 128
          %s1399 = scalar_lea.hbm %s11, %s1398
          %s1401 = sshll.u32 %s1390, 4
          %s1402 = int_to_ptr.vmem [resolvable:$true] %s1401
          %1404 = dma.vmem_to_hbm [thread:$0]  %s1402, 128, %s1399, %s1387
        $region108: #{tpu_custom_call.1} parent=63 // pred_fallthru
          _
      $region64: #{tpu_custom_call.1} parent=5 // pred_fallthru
        _
      %p1405 = scmp.le.s32.totalorder 2, %s29
      // Predicated region
      $region109: #{tpu_custom_call.1} parent=5 // pred_check
        %p1406 = pneg %p1405
      $region110: #{tpu_custom_call.1} parent=5 // pred_check_branch
        %1408 = sbr.rel (%p1406) target = $region112
      $region111: #{tpu_custom_call.1} parent=5 // pred_region
        %s1409 = ssub.s32 %s29, 2
        // Predicated region
        $region113: #{tpu_custom_call.1} parent=111 // pred_check
          %p1410 = pneg %p327
        $region114: #{tpu_custom_call.1} parent=111 // pred_check_branch
          %1412 = sbr.rel (%p1410) target = $region116
        $region115: #{tpu_custom_call.1} parent=111 // pred_region
          %s1413 = sand.u32 %s312, 1
          %s1414 = scalar_lea.sflag [#allocation6], %s1413
          %s1415 = sand.u32 %s312, 1
          %s1416 = smul.addr %s1415, 8
          %s1417 = scalar_lea.vmem [#allocation19], %s1416
          %1418 = dma.done %s1414, 128
        $region116: #{tpu_custom_call.1} parent=111 // pred_fallthru
          _
      $region112: #{tpu_custom_call.1} parent=5 // pred_fallthru
        _
    $region6: #{tpu_custom_call.1} parent=1 // loop_footer
      %s33 = sadd.s32 1, %s29
    $region7: #{tpu_custom_call.1} parent=1 // loop_footer_branch
      %28 = sbr.rel target = $region3
    $region8: #{tpu_custom_call.1} parent=1 // loop_exit
      _
    %1419 = vsyncpa [#allocation5], 1
    %s1420 = scalar_lea.sflag [#allocation5], 1
    %1421 = vsyncpa %s1420, 1
    %1422 = vsyncpa [#allocation8], 1
    %s1423 = scalar_lea.sflag [#allocation8], 1
    %1424 = vsyncpa %s1423, 1
    %1425 = vsyncpa [#allocation11], 1
    %1426 = vsyncpa [#allocation14], 1
    %1427 = vsyncpa [#allocation17], 1
    %1428 = vsyncpa [#allocation6], 1
    %s1429 = scalar_lea.sflag [#allocation6], 1
    %1430 = vsyncpa %s1429, 1

</llo_original>
